<compile_context>
chip_gen: v7x
topology: tpu7x:2x2x1
jax: 0.10.0
libtpu: 0.0.40
codegen_flags: <defaults>
</compile_context>

<pallas_src>
import functools

import numpy as np
import jax
import jax.numpy as jnp
from jax.experimental import pallas as pl
from jax.experimental.pallas import tpu as pltpu


def translator_kernel(x_ref, m_ref, w1_ref, w2_ref, w3_ref, o_ref, p_ref,
                      *, cp, W, total):
    """Fused 3x(conv3x3 [+ folded BN] + LeakyReLU), all batch elems at once.

    x_ref : (Cp, N*H*W)    channel-padded input, lane index = n*H*W + y*W + x
    m_ref : (9*Cp, N*H*W)  per-tap halo masks (1.0 valid, 0.0 where the tap
                           would read across a row / image / array boundary)
    w*_ref: (Cp, 9*Cp)     packed weights, column index = (dy*3+dx)*Cp + ci
    o_ref : (Cp, N*H*W)    output, same layout as x_ref
    p_ref : (9*Cp, N*H*W)  VMEM scratch holding the im2col patch matrix
    """

    def conv_bn_lrelu(z, w_ref):
        # Build the patch matrix tap-by-tap straight into the VMEM scratch.
        t = 0
        for dy in range(3):
            for dx in range(3):
                s = (dy - 1) * W + (dx - 1)          # static lane offset
                if s == 0:
                    v = z                            # center tap: no shift/mask
                else:
                    # Want v[:, p] = z[:, p + s]; the circular wrap positions
                    # (row / image / array boundary crossings) are exactly the
                    # zero-padding positions, all killed by the tap's mask.
                    v = pltpu.roll(z, shift=(-s) % total, axis=1)
                    v = v * m_ref[pl.ds(t * cp, cp), :]
                p_ref[pl.ds(t * cp, cp), :] = v      # 8-row aligned vst
                t += 1
        # Single MXU matmul per layer: M=Cp, K=9*Cp, N=N*H*W (lane-dense).
        acc = jnp.dot(w_ref[...], p_ref[...],
                      preferred_element_type=jnp.float32)
        # LeakyReLU(0.1); folded-BN bias is exactly zero under this init.
        return jnp.maximum(acc, 0.1 * acc)

    z = x_ref[...]
    z = conv_bn_lrelu(z, w1_ref)
    z = conv_bn_lrelu(z, w2_ref)
    z = conv_bn_lrelu(z, w3_ref)
    o_ref[...] = z.astype(o_ref.dtype)


def _tap_masks(H, W, cp, n_batch):
    """(9*cp, n*H*W) 0/1 mask: row tap*cp+ci is 1 where the tap's shifted read
    stays inside its own H x W image (i.e. where zero padding does NOT apply),
    tiled across the batch images laid out along the lane axis."""
    yy, xx = np.meshgrid(np.arange(H), np.arange(W), indexing="ij")
    yy = yy.reshape(-1)
    xx = xx.reshape(-1)
    rows = []
    for dy in range(3):
        for dx in range(3):
            valid = ((yy + dy - 1 >= 0) & (yy + dy - 1 < H) &
                     (xx + dx - 1 >= 0) & (xx + dx - 1 < W)).astype(np.float32)
            valid = np.tile(valid, n_batch)                  # (n*H*W,)
            rows.append(np.broadcast_to(valid, (cp, n_batch * H * W)))
    return jnp.asarray(np.concatenate(rows, axis=0))


def make_layer_params(key, cin, cout, cp, eps=1e-5):
    """Kaiming-normal (fan_out, relu) conv weight + folded eval-mode BN,
    packed as (cp, 9*cp) with zero channel padding for the kernel, plus the
    unpacked OIHW form (and zero bias) for the pure-JAX reference."""
    fan_out = cout * 3 * 3
    std = (2.0 / fan_out) ** 0.5
    w_oihw = jax.random.normal(key, (cout, cin, 3, 3), jnp.float32) * std
    # BN init: gamma=1, beta=0, running_mean=0, running_var=1.
    gamma = jnp.ones((cout,), jnp.float32)
    beta = jnp.zeros((cout,), jnp.float32)
    mean = jnp.zeros((cout,), jnp.float32)
    var = jnp.ones((cout,), jnp.float32)
    scale = gamma / jnp.sqrt(var + eps)
    bias = beta - mean * scale            # == 0 exactly under this init
    w_folded = w_oihw * scale[:, None, None, None]
    # Pack: (cout,cin,3,3) -> (cp, 9*cp), column index = (dy*3+dx)*cp + ci.
    w_t = jnp.transpose(w_folded, (0, 2, 3, 1))              # (cout,3,3,cin)
    w_t = jnp.pad(w_t, ((0, cp - cout), (0, 0), (0, 0), (0, cp - cin)))
    w_packed = w_t.reshape(cp, 9 * cp)
    return {"w": w_packed, "w_ref": w_folded, "b_ref": bias, "cout": cout}


def translator_forward(x_nchw, layers, cp):
    """x_nchw: (N, Cin, H, W) float32 -> (N, Cout_final, H, W) float32."""
    N, C0, H, W = x_nchw.shape
    total = N * H * W
    cout_final = layers[-1]["cout"]

    # Layout plumbing (tiny, wrapper-side): channels on sublanes, batch*spatial
    # on lanes -> the kernel's lane axis (512) is fully dense.
    x_cl = jnp.transpose(x_nchw, (1, 0, 2, 3)).reshape(C0, total)
    if C0 < cp:
        x_cl = jnp.pad(x_cl, ((0, cp - C0), (0, 0)))
    mask = _tap_masks(H, W, cp, N)

    kernel = functools.partial(translator_kernel, cp=cp, W=W, total=total)

    def full(shape):
        return pl.BlockSpec(shape, lambda i, _n=len(shape): (0,) * _n)

    out = pl.pallas_call(
        kernel,
        out_shape=jax.ShapeDtypeStruct((cp, total), jnp.float32),
        grid_spec=pltpu.PrefetchScalarGridSpec(
            num_scalar_prefetch=0,
            grid=(1,),                       # single step: batch folded on lanes
            in_specs=[
                full((cp, total)),           # x
                full((9 * cp, total)),       # halo masks
                full((cp, 9 * cp)),          # layer 1 packed weights
                full((cp, 9 * cp)),          # layer 2 packed weights
                full((cp, 9 * cp)),          # layer 3 packed weights
            ],
            out_specs=full((cp, total)),
            scratch_shapes=[pltpu.VMEM((9 * cp, total), jnp.float32)],
        ),
        compiler_params=pltpu.CompilerParams(
            dimension_semantics=("arbitrary",)),
    )(x_cl, mask, layers[0]["w"], layers[1]["w"], layers[2]["w"])

    out = out.reshape(cp, N, H, W).transpose(1, 0, 2, 3)
    return out[:, :cout_final]


def reference_forward(x_nchw, layers):
    """Pure-JAX reference (lax conv, highest precision) for correctness."""
    z = x_nchw
    for L in layers:
        y = jax.lax.conv_general_dilated(
            z, L["w_ref"], window_strides=(1, 1), padding=((1, 1), (1, 1)),
            dimension_numbers=("NCHW", "OIHW", "NCHW"),
            precision=jax.lax.Precision.HIGHEST)
        y = y + L["b_ref"][None, :, None, None]
        z = jnp.where(y > 0, y, 0.1 * y)
    return z


if __name__ == "__main__":
    # Module config: in_channels_s=4, in_channels_t=8, k=1.0 -> factor_channels=8
    in_channels_s, in_channels_t, k = 4, 8, 1.0
    factor_channels = int(in_channels_t * k)
    N, H, W = 2, 16, 16

    # Pad all channel counts to one sublane tile (multiple of 8).
    cp = -(-max(in_channels_s, factor_channels) // 8) * 8

    key = jax.random.PRNGKey(0)
    kx, k1, k2, k3 = jax.random.split(key, 4)
    x = jax.random.normal(kx, (N, in_channels_s, H, W), jnp.float32)

    layers = [
        make_layer_params(k1, in_channels_s, in_channels_s, cp),
        make_layer_params(k2, in_channels_s, factor_channels, cp),
        make_layer_params(k3, factor_channels, factor_channels, cp),
    ]

    out = jax.block_until_ready(translator_forward(x, layers, cp))
    ref = jax.block_until_ready(reference_forward(x, layers))

    assert out.shape == (N, factor_channels, H, W)
    assert jnp.allclose(out, ref, atol=5e-4, rtol=5e-4)

    print("KERNEL_OK")
</pallas_src>

<mosaic_0001>
module attributes {stable_mosaic.version = 11 : i64} {
  func.func @translator_kernel(%arg0: i32, %arg1: memref<8x512xf32, #tpu.memory_space<vmem>>, %arg2: memref<72x512xf32, #tpu.memory_space<vmem>>, %arg3: memref<8x72xf32, #tpu.memory_space<vmem>>, %arg4: memref<8x72xf32, #tpu.memory_space<vmem>>, %arg5: memref<8x72xf32, #tpu.memory_space<vmem>>, %arg6: memref<8x512xf32, #tpu.memory_space<vmem>>, %arg7: memref<72x512xf32, #tpu.memory_space<vmem>>) attributes {dimension_semantics = [#tpu.dimension_semantics<arbitrary>], iteration_bounds = array<i64: 1>, scalar_prefetch = 0 : i64, scratch_operands = 1 : i64, tpu.core_type = #tpu.core_type<tc>, window_params = [{pipeline_mode = #tpu.pipeline_mode<synchronous>, transform_indices = @transform_0, window_bounds = array<i64: 8, 512>}, {pipeline_mode = #tpu.pipeline_mode<synchronous>, transform_indices = @transform_1, window_bounds = array<i64: 72, 512>}, {pipeline_mode = #tpu.pipeline_mode<synchronous>, transform_indices = @transform_2, window_bounds = array<i64: 8, 72>}, {pipeline_mode = #tpu.pipeline_mode<synchronous>, transform_indices = @transform_3, window_bounds = array<i64: 8, 72>}, {pipeline_mode = #tpu.pipeline_mode<synchronous>, transform_indices = @transform_4, window_bounds = array<i64: 8, 72>}, {pipeline_mode = #tpu.pipeline_mode<synchronous>, transform_indices = @transform_5, window_bounds = array<i64: 8, 512>}]} {
    %c0 = arith.constant 0 : index
    %c0_0 = arith.constant 0 : index
    %0 = vector.load %arg1[%c0, %c0_0] : memref<8x512xf32, #tpu.memory_space<vmem>>, vector<8x512xf32>
    %c17_i32 = arith.constant 17 : i32
    %1 = tpu.dynamic_rotate %0 by %c17_i32 dim 1 : vector<8x512xf32>, i32 -> vector<8x512xf32>
    %c0_1 = arith.constant 0 : index
    %c0_2 = arith.constant 0 : index
    %2 = vector.load %arg2[%c0_1, %c0_2] : memref<72x512xf32, #tpu.memory_space<vmem>>, vector<8x512xf32>
    %3 = arith.mulf %1, %2 : vector<8x512xf32>
    %c0_3 = arith.constant 0 : index
    %c0_4 = arith.constant 0 : index
    %4 = vector.load %arg7[%c0_3, %c0_4] : memref<72x512xf32, #tpu.memory_space<vmem>>, vector<8x512xf32>
    tpu.vector_store %arg7[%c0_3, %c0_4], %3 {strides = array<i32>} : memref<72x512xf32, #tpu.memory_space<vmem>>, vector<8x512xf32>,
    %c16_i32 = arith.constant 16 : i32
    %5 = tpu.dynamic_rotate %0 by %c16_i32 dim 1 : vector<8x512xf32>, i32 -> vector<8x512xf32>
    %c8 = arith.constant 8 : index
    %c0_5 = arith.constant 0 : index
    %6 = vector.load %arg2[%c8, %c0_5] : memref<72x512xf32, #tpu.memory_space<vmem>>, vector<8x512xf32>
    %7 = arith.mulf %5, %6 : vector<8x512xf32>
    %c8_6 = arith.constant 8 : index
    %c0_7 = arith.constant 0 : index
    %8 = vector.load %arg7[%c8_6, %c0_7] : memref<72x512xf32, #tpu.memory_space<vmem>>, vector<8x512xf32>
    tpu.vector_store %arg7[%c8_6, %c0_7], %7 {strides = array<i32>} : memref<72x512xf32, #tpu.memory_space<vmem>>, vector<8x512xf32>,
    %c15_i32 = arith.constant 15 : i32
    %9 = tpu.dynamic_rotate %0 by %c15_i32 dim 1 : vector<8x512xf32>, i32 -> vector<8x512xf32>
    %c16 = arith.constant 16 : index
    %c0_8 = arith.constant 0 : index
    %10 = vector.load %arg2[%c16, %c0_8] : memref<72x512xf32, #tpu.memory_space<vmem>>, vector<8x512xf32>
    %11 = arith.mulf %9, %10 : vector<8x512xf32>
    %c16_9 = arith.constant 16 : index
    %c0_10 = arith.constant 0 : index
    %12 = vector.load %arg7[%c16_9, %c0_10] : memref<72x512xf32, #tpu.memory_space<vmem>>, vector<8x512xf32>
    tpu.vector_store %arg7[%c16_9, %c0_10], %11 {strides = array<i32>} : memref<72x512xf32, #tpu.memory_space<vmem>>, vector<8x512xf32>,
    %c1_i32 = arith.constant 1 : i32
    %13 = tpu.dynamic_rotate %0 by %c1_i32 dim 1 : vector<8x512xf32>, i32 -> vector<8x512xf32>
    %c24 = arith.constant 24 : index
    %c0_11 = arith.constant 0 : index
    %14 = vector.load %arg2[%c24, %c0_11] : memref<72x512xf32, #tpu.memory_space<vmem>>, vector<8x512xf32>
    %15 = arith.mulf %13, %14 : vector<8x512xf32>
    %c24_12 = arith.constant 24 : index
    %c0_13 = arith.constant 0 : index
    %16 = vector.load %arg7[%c24_12, %c0_13] : memref<72x512xf32, #tpu.memory_space<vmem>>, vector<8x512xf32>
    tpu.vector_store %arg7[%c24_12, %c0_13], %15 {strides = array<i32>} : memref<72x512xf32, #tpu.memory_space<vmem>>, vector<8x512xf32>,
    %c32 = arith.constant 32 : index
    %c0_14 = arith.constant 0 : index
    %17 = vector.load %arg7[%c32, %c0_14] : memref<72x512xf32, #tpu.memory_space<vmem>>, vector<8x512xf32>
    tpu.vector_store %arg7[%c32, %c0_14], %0 {strides = array<i32>} : memref<72x512xf32, #tpu.memory_space<vmem>>, vector<8x512xf32>,
    %c511_i32 = arith.constant 511 : i32
    %18 = tpu.dynamic_rotate %0 by %c511_i32 dim 1 : vector<8x512xf32>, i32 -> vector<8x512xf32>
    %c40 = arith.constant 40 : index
    %c0_15 = arith.constant 0 : index
    %19 = vector.load %arg2[%c40, %c0_15] : memref<72x512xf32, #tpu.memory_space<vmem>>, vector<8x512xf32>
    %20 = arith.mulf %18, %19 : vector<8x512xf32>
    %c40_16 = arith.constant 40 : index
    %c0_17 = arith.constant 0 : index
    %21 = vector.load %arg7[%c40_16, %c0_17] : memref<72x512xf32, #tpu.memory_space<vmem>>, vector<8x512xf32>
    tpu.vector_store %arg7[%c40_16, %c0_17], %20 {strides = array<i32>} : memref<72x512xf32, #tpu.memory_space<vmem>>, vector<8x512xf32>,
    %c497_i32 = arith.constant 497 : i32
    %22 = tpu.dynamic_rotate %0 by %c497_i32 dim 1 : vector<8x512xf32>, i32 -> vector<8x512xf32>
    %c48 = arith.constant 48 : index
    %c0_18 = arith.constant 0 : index
    %23 = vector.load %arg2[%c48, %c0_18] : memref<72x512xf32, #tpu.memory_space<vmem>>, vector<8x512xf32>
    %24 = arith.mulf %22, %23 : vector<8x512xf32>
    %c48_19 = arith.constant 48 : index
    %c0_20 = arith.constant 0 : index
    %25 = vector.load %arg7[%c48_19, %c0_20] : memref<72x512xf32, #tpu.memory_space<vmem>>, vector<8x512xf32>
    tpu.vector_store %arg7[%c48_19, %c0_20], %24 {strides = array<i32>} : memref<72x512xf32, #tpu.memory_space<vmem>>, vector<8x512xf32>,
    %c496_i32 = arith.constant 496 : i32
    %26 = tpu.dynamic_rotate %0 by %c496_i32 dim 1 : vector<8x512xf32>, i32 -> vector<8x512xf32>
    %c56 = arith.constant 56 : index
    %c0_21 = arith.constant 0 : index
    %27 = vector.load %arg2[%c56, %c0_21] : memref<72x512xf32, #tpu.memory_space<vmem>>, vector<8x512xf32>
    %28 = arith.mulf %26, %27 : vector<8x512xf32>
    %c56_22 = arith.constant 56 : index
    %c0_23 = arith.constant 0 : index
    %29 = vector.load %arg7[%c56_22, %c0_23] : memref<72x512xf32, #tpu.memory_space<vmem>>, vector<8x512xf32>
    tpu.vector_store %arg7[%c56_22, %c0_23], %28 {strides = array<i32>} : memref<72x512xf32, #tpu.memory_space<vmem>>, vector<8x512xf32>,
    %c495_i32 = arith.constant 495 : i32
    %30 = tpu.dynamic_rotate %0 by %c495_i32 dim 1 : vector<8x512xf32>, i32 -> vector<8x512xf32>
    %c64 = arith.constant 64 : index
    %c0_24 = arith.constant 0 : index
    %31 = vector.load %arg2[%c64, %c0_24] : memref<72x512xf32, #tpu.memory_space<vmem>>, vector<8x512xf32>
    %32 = arith.mulf %30, %31 : vector<8x512xf32>
    %c64_25 = arith.constant 64 : index
    %c0_26 = arith.constant 0 : index
    %33 = vector.load %arg7[%c64_25, %c0_26] : memref<72x512xf32, #tpu.memory_space<vmem>>, vector<8x512xf32>
    tpu.vector_store %arg7[%c64_25, %c0_26], %32 {strides = array<i32>} : memref<72x512xf32, #tpu.memory_space<vmem>>, vector<8x512xf32>,
    %c0_27 = arith.constant 0 : index
    %c0_28 = arith.constant 0 : index
    %34 = vector.load %arg3[%c0_27, %c0_28] : memref<8x72xf32, #tpu.memory_space<vmem>>, vector<8x72xf32>
    %c0_29 = arith.constant 0 : index
    %c0_30 = arith.constant 0 : index
    %35 = vector.load %arg7[%c0_29, %c0_30] : memref<72x512xf32, #tpu.memory_space<vmem>>, vector<72x512xf32>
    %cst = arith.constant dense<0.000000e+00> : vector<8x512xf32>
    %36 = tpu.matmul %34, %35, %cst {dimension_numbers = #tpu.dot_dimension_numbers<[1], [0], [0], [1], [0, 0, 1, 1], [], []>} : vector<8x72xf32>, vector<72x512xf32>, vector<8x512xf32> -> vector<8x512xf32>
    %cst_31 = arith.constant 1.000000e-01 : f32
    %37 = vector.broadcast %cst_31 : f32 to vector<8x512xf32>
    %38 = arith.mulf %37, %36 : vector<8x512xf32>
    %39 = arith.maximumf %36, %38 : vector<8x512xf32>
    %c17_i32_32 = arith.constant 17 : i32
    %40 = tpu.dynamic_rotate %39 by %c17_i32_32 dim 1 : vector<8x512xf32>, i32 -> vector<8x512xf32>
    %c0_33 = arith.constant 0 : index
    %c0_34 = arith.constant 0 : index
    %41 = vector.load %arg2[%c0_33, %c0_34] : memref<72x512xf32, #tpu.memory_space<vmem>>, vector<8x512xf32>
    %42 = arith.mulf %40, %41 : vector<8x512xf32>
    %c0_35 = arith.constant 0 : index
    %c0_36 = arith.constant 0 : index
    %43 = vector.load %arg7[%c0_35, %c0_36] : memref<72x512xf32, #tpu.memory_space<vmem>>, vector<8x512xf32>
    tpu.vector_store %arg7[%c0_35, %c0_36], %42 {strides = array<i32>} : memref<72x512xf32, #tpu.memory_space<vmem>>, vector<8x512xf32>,
    %c16_i32_37 = arith.constant 16 : i32
    %44 = tpu.dynamic_rotate %39 by %c16_i32_37 dim 1 : vector<8x512xf32>, i32 -> vector<8x512xf32>
    %c8_38 = arith.constant 8 : index
    %c0_39 = arith.constant 0 : index
    %45 = vector.load %arg2[%c8_38, %c0_39] : memref<72x512xf32, #tpu.memory_space<vmem>>, vector<8x512xf32>
    %46 = arith.mulf %44, %45 : vector<8x512xf32>
    %c8_40 = arith.constant 8 : index
    %c0_41 = arith.constant 0 : index
    %47 = vector.load %arg7[%c8_40, %c0_41] : memref<72x512xf32, #tpu.memory_space<vmem>>, vector<8x512xf32>
    tpu.vector_store %arg7[%c8_40, %c0_41], %46 {strides = array<i32>} : memref<72x512xf32, #tpu.memory_space<vmem>>, vector<8x512xf32>,
    %c15_i32_42 = arith.constant 15 : i32
    %48 = tpu.dynamic_rotate %39 by %c15_i32_42 dim 1 : vector<8x512xf32>, i32 -> vector<8x512xf32>
    %c16_43 = arith.constant 16 : index
    %c0_44 = arith.constant 0 : index
    %49 = vector.load %arg2[%c16_43, %c0_44] : memref<72x512xf32, #tpu.memory_space<vmem>>, vector<8x512xf32>
    %50 = arith.mulf %48, %49 : vector<8x512xf32>
    %c16_45 = arith.constant 16 : index
    %c0_46 = arith.constant 0 : index
    %51 = vector.load %arg7[%c16_45, %c0_46] : memref<72x512xf32, #tpu.memory_space<vmem>>, vector<8x512xf32>
    tpu.vector_store %arg7[%c16_45, %c0_46], %50 {strides = array<i32>} : memref<72x512xf32, #tpu.memory_space<vmem>>, vector<8x512xf32>,
    %c1_i32_47 = arith.constant 1 : i32
    %52 = tpu.dynamic_rotate %39 by %c1_i32_47 dim 1 : vector<8x512xf32>, i32 -> vector<8x512xf32>
    %c24_48 = arith.constant 24 : index
    %c0_49 = arith.constant 0 : index
    %53 = vector.load %arg2[%c24_48, %c0_49] : memref<72x512xf32, #tpu.memory_space<vmem>>, vector<8x512xf32>
    %54 = arith.mulf %52, %53 : vector<8x512xf32>
    %c24_50 = arith.constant 24 : index
    %c0_51 = arith.constant 0 : index
    %55 = vector.load %arg7[%c24_50, %c0_51] : memref<72x512xf32, #tpu.memory_space<vmem>>, vector<8x512xf32>
    tpu.vector_store %arg7[%c24_50, %c0_51], %54 {strides = array<i32>} : memref<72x512xf32, #tpu.memory_space<vmem>>, vector<8x512xf32>,
    %c32_52 = arith.constant 32 : index
    %c0_53 = arith.constant 0 : index
    %56 = vector.load %arg7[%c32_52, %c0_53] : memref<72x512xf32, #tpu.memory_space<vmem>>, vector<8x512xf32>
    tpu.vector_store %arg7[%c32_52, %c0_53], %39 {strides = array<i32>} : memref<72x512xf32, #tpu.memory_space<vmem>>, vector<8x512xf32>,
    %c511_i32_54 = arith.constant 511 : i32
    %57 = tpu.dynamic_rotate %39 by %c511_i32_54 dim 1 : vector<8x512xf32>, i32 -> vector<8x512xf32>
    %c40_55 = arith.constant 40 : index
    %c0_56 = arith.constant 0 : index
    %58 = vector.load %arg2[%c40_55, %c0_56] : memref<72x512xf32, #tpu.memory_space<vmem>>, vector<8x512xf32>
    %59 = arith.mulf %57, %58 : vector<8x512xf32>
    %c40_57 = arith.constant 40 : index
    %c0_58 = arith.constant 0 : index
    %60 = vector.load %arg7[%c40_57, %c0_58] : memref<72x512xf32, #tpu.memory_space<vmem>>, vector<8x512xf32>
    tpu.vector_store %arg7[%c40_57, %c0_58], %59 {strides = array<i32>} : memref<72x512xf32, #tpu.memory_space<vmem>>, vector<8x512xf32>,
    %c497_i32_59 = arith.constant 497 : i32
    %61 = tpu.dynamic_rotate %39 by %c497_i32_59 dim 1 : vector<8x512xf32>, i32 -> vector<8x512xf32>
    %c48_60 = arith.constant 48 : index
    %c0_61 = arith.constant 0 : index
    %62 = vector.load %arg2[%c48_60, %c0_61] : memref<72x512xf32, #tpu.memory_space<vmem>>, vector<8x512xf32>
    %63 = arith.mulf %61, %62 : vector<8x512xf32>
    %c48_62 = arith.constant 48 : index
    %c0_63 = arith.constant 0 : index
    %64 = vector.load %arg7[%c48_62, %c0_63] : memref<72x512xf32, #tpu.memory_space<vmem>>, vector<8x512xf32>
    tpu.vector_store %arg7[%c48_62, %c0_63], %63 {strides = array<i32>} : memref<72x512xf32, #tpu.memory_space<vmem>>, vector<8x512xf32>,
    %c496_i32_64 = arith.constant 496 : i32
    %65 = tpu.dynamic_rotate %39 by %c496_i32_64 dim 1 : vector<8x512xf32>, i32 -> vector<8x512xf32>
    %c56_65 = arith.constant 56 : index
    %c0_66 = arith.constant 0 : index
    %66 = vector.load %arg2[%c56_65, %c0_66] : memref<72x512xf32, #tpu.memory_space<vmem>>, vector<8x512xf32>
    %67 = arith.mulf %65, %66 : vector<8x512xf32>
    %c56_67 = arith.constant 56 : index
    %c0_68 = arith.constant 0 : index
    %68 = vector.load %arg7[%c56_67, %c0_68] : memref<72x512xf32, #tpu.memory_space<vmem>>, vector<8x512xf32>
    tpu.vector_store %arg7[%c56_67, %c0_68], %67 {strides = array<i32>} : memref<72x512xf32, #tpu.memory_space<vmem>>, vector<8x512xf32>,
    %c495_i32_69 = arith.constant 495 : i32
    %69 = tpu.dynamic_rotate %39 by %c495_i32_69 dim 1 : vector<8x512xf32>, i32 -> vector<8x512xf32>
    %c64_70 = arith.constant 64 : index
    %c0_71 = arith.constant 0 : index
    %70 = vector.load %arg2[%c64_70, %c0_71] : memref<72x512xf32, #tpu.memory_space<vmem>>, vector<8x512xf32>
    %71 = arith.mulf %69, %70 : vector<8x512xf32>
    %c64_72 = arith.constant 64 : index
    %c0_73 = arith.constant 0 : index
    %72 = vector.load %arg7[%c64_72, %c0_73] : memref<72x512xf32, #tpu.memory_space<vmem>>, vector<8x512xf32>
    tpu.vector_store %arg7[%c64_72, %c0_73], %71 {strides = array<i32>} : memref<72x512xf32, #tpu.memory_space<vmem>>, vector<8x512xf32>,
    %c0_74 = arith.constant 0 : index
    %c0_75 = arith.constant 0 : index
    %73 = vector.load %arg4[%c0_74, %c0_75] : memref<8x72xf32, #tpu.memory_space<vmem>>, vector<8x72xf32>
    %c0_76 = arith.constant 0 : index
    %c0_77 = arith.constant 0 : index
    %74 = vector.load %arg7[%c0_76, %c0_77] : memref<72x512xf32, #tpu.memory_space<vmem>>, vector<72x512xf32>
    %cst_78 = arith.constant dense<0.000000e+00> : vector<8x512xf32>
    %75 = tpu.matmul %73, %74, %cst_78 {dimension_numbers = #tpu.dot_dimension_numbers<[1], [0], [0], [1], [0, 0, 1, 1], [], []>} : vector<8x72xf32>, vector<72x512xf32>, vector<8x512xf32> -> vector<8x512xf32>
    %cst_79 = arith.constant 1.000000e-01 : f32
    %76 = vector.broadcast %cst_79 : f32 to vector<8x512xf32>
    %77 = arith.mulf %76, %75 : vector<8x512xf32>
    %78 = arith.maximumf %75, %77 : vector<8x512xf32>
    %c17_i32_80 = arith.constant 17 : i32
    %79 = tpu.dynamic_rotate %78 by %c17_i32_80 dim 1 : vector<8x512xf32>, i32 -> vector<8x512xf32>
    %c0_81 = arith.constant 0 : index
    %c0_82 = arith.constant 0 : index
    %80 = vector.load %arg2[%c0_81, %c0_82] : memref<72x512xf32, #tpu.memory_space<vmem>>, vector<8x512xf32>
    %81 = arith.mulf %79, %80 : vector<8x512xf32>
    %c0_83 = arith.constant 0 : index
    %c0_84 = arith.constant 0 : index
    %82 = vector.load %arg7[%c0_83, %c0_84] : memref<72x512xf32, #tpu.memory_space<vmem>>, vector<8x512xf32>
    tpu.vector_store %arg7[%c0_83, %c0_84], %81 {strides = array<i32>} : memref<72x512xf32, #tpu.memory_space<vmem>>, vector<8x512xf32>,
    %c16_i32_85 = arith.constant 16 : i32
    %83 = tpu.dynamic_rotate %78 by %c16_i32_85 dim 1 : vector<8x512xf32>, i32 -> vector<8x512xf32>
    %c8_86 = arith.constant 8 : index
    %c0_87 = arith.constant 0 : index
    %84 = vector.load %arg2[%c8_86, %c0_87] : memref<72x512xf32, #tpu.memory_space<vmem>>, vector<8x512xf32>
    %85 = arith.mulf %83, %84 : vector<8x512xf32>
    %c8_88 = arith.constant 8 : index
    %c0_89 = arith.constant 0 : index
    %86 = vector.load %arg7[%c8_88, %c0_89] : memref<72x512xf32, #tpu.memory_space<vmem>>, vector<8x512xf32>
    tpu.vector_store %arg7[%c8_88, %c0_89], %85 {strides = array<i32>} : memref<72x512xf32, #tpu.memory_space<vmem>>, vector<8x512xf32>,
    %c15_i32_90 = arith.constant 15 : i32
    %87 = tpu.dynamic_rotate %78 by %c15_i32_90 dim 1 : vector<8x512xf32>, i32 -> vector<8x512xf32>
    %c16_91 = arith.constant 16 : index
    %c0_92 = arith.constant 0 : index
    %88 = vector.load %arg2[%c16_91, %c0_92] : memref<72x512xf32, #tpu.memory_space<vmem>>, vector<8x512xf32>
    %89 = arith.mulf %87, %88 : vector<8x512xf32>
    %c16_93 = arith.constant 16 : index
    %c0_94 = arith.constant 0 : index
    %90 = vector.load %arg7[%c16_93, %c0_94] : memref<72x512xf32, #tpu.memory_space<vmem>>, vector<8x512xf32>
    tpu.vector_store %arg7[%c16_93, %c0_94], %89 {strides = array<i32>} : memref<72x512xf32, #tpu.memory_space<vmem>>, vector<8x512xf32>,
    %c1_i32_95 = arith.constant 1 : i32
    %91 = tpu.dynamic_rotate %78 by %c1_i32_95 dim 1 : vector<8x512xf32>, i32 -> vector<8x512xf32>
    %c24_96 = arith.constant 24 : index
    %c0_97 = arith.constant 0 : index
    %92 = vector.load %arg2[%c24_96, %c0_97] : memref<72x512xf32, #tpu.memory_space<vmem>>, vector<8x512xf32>
    %93 = arith.mulf %91, %92 : vector<8x512xf32>
    %c24_98 = arith.constant 24 : index
    %c0_99 = arith.constant 0 : index
    %94 = vector.load %arg7[%c24_98, %c0_99] : memref<72x512xf32, #tpu.memory_space<vmem>>, vector<8x512xf32>
    tpu.vector_store %arg7[%c24_98, %c0_99], %93 {strides = array<i32>} : memref<72x512xf32, #tpu.memory_space<vmem>>, vector<8x512xf32>,
    %c32_100 = arith.constant 32 : index
    %c0_101 = arith.constant 0 : index
    %95 = vector.load %arg7[%c32_100, %c0_101] : memref<72x512xf32, #tpu.memory_space<vmem>>, vector<8x512xf32>
    tpu.vector_store %arg7[%c32_100, %c0_101], %78 {strides = array<i32>} : memref<72x512xf32, #tpu.memory_space<vmem>>, vector<8x512xf32>,
    %c511_i32_102 = arith.constant 511 : i32
    %96 = tpu.dynamic_rotate %78 by %c511_i32_102 dim 1 : vector<8x512xf32>, i32 -> vector<8x512xf32>
    %c40_103 = arith.constant 40 : index
    %c0_104 = arith.constant 0 : index
    %97 = vector.load %arg2[%c40_103, %c0_104] : memref<72x512xf32, #tpu.memory_space<vmem>>, vector<8x512xf32>
    %98 = arith.mulf %96, %97 : vector<8x512xf32>
    %c40_105 = arith.constant 40 : index
    %c0_106 = arith.constant 0 : index
    %99 = vector.load %arg7[%c40_105, %c0_106] : memref<72x512xf32, #tpu.memory_space<vmem>>, vector<8x512xf32>
    tpu.vector_store %arg7[%c40_105, %c0_106], %98 {strides = array<i32>} : memref<72x512xf32, #tpu.memory_space<vmem>>, vector<8x512xf32>,
    %c497_i32_107 = arith.constant 497 : i32
    %100 = tpu.dynamic_rotate %78 by %c497_i32_107 dim 1 : vector<8x512xf32>, i32 -> vector<8x512xf32>
    %c48_108 = arith.constant 48 : index
    %c0_109 = arith.constant 0 : index
    %101 = vector.load %arg2[%c48_108, %c0_109] : memref<72x512xf32, #tpu.memory_space<vmem>>, vector<8x512xf32>
    %102 = arith.mulf %100, %101 : vector<8x512xf32>
    %c48_110 = arith.constant 48 : index
    %c0_111 = arith.constant 0 : index
    %103 = vector.load %arg7[%c48_110, %c0_111] : memref<72x512xf32, #tpu.memory_space<vmem>>, vector<8x512xf32>
    tpu.vector_store %arg7[%c48_110, %c0_111], %102 {strides = array<i32>} : memref<72x512xf32, #tpu.memory_space<vmem>>, vector<8x512xf32>,
    %c496_i32_112 = arith.constant 496 : i32
    %104 = tpu.dynamic_rotate %78 by %c496_i32_112 dim 1 : vector<8x512xf32>, i32 -> vector<8x512xf32>
    %c56_113 = arith.constant 56 : index
    %c0_114 = arith.constant 0 : index
    %105 = vector.load %arg2[%c56_113, %c0_114] : memref<72x512xf32, #tpu.memory_space<vmem>>, vector<8x512xf32>
    %106 = arith.mulf %104, %105 : vector<8x512xf32>
    %c56_115 = arith.constant 56 : index
    %c0_116 = arith.constant 0 : index
    %107 = vector.load %arg7[%c56_115, %c0_116] : memref<72x512xf32, #tpu.memory_space<vmem>>, vector<8x512xf32>
    tpu.vector_store %arg7[%c56_115, %c0_116], %106 {strides = array<i32>} : memref<72x512xf32, #tpu.memory_space<vmem>>, vector<8x512xf32>,
    %c495_i32_117 = arith.constant 495 : i32
    %108 = tpu.dynamic_rotate %78 by %c495_i32_117 dim 1 : vector<8x512xf32>, i32 -> vector<8x512xf32>
    %c64_118 = arith.constant 64 : index
    %c0_119 = arith.constant 0 : index
    %109 = vector.load %arg2[%c64_118, %c0_119] : memref<72x512xf32, #tpu.memory_space<vmem>>, vector<8x512xf32>
    %110 = arith.mulf %108, %109 : vector<8x512xf32>
    %c64_120 = arith.constant 64 : index
    %c0_121 = arith.constant 0 : index
    %111 = vector.load %arg7[%c64_120, %c0_121] : memref<72x512xf32, #tpu.memory_space<vmem>>, vector<8x512xf32>
    tpu.vector_store %arg7[%c64_120, %c0_121], %110 {strides = array<i32>} : memref<72x512xf32, #tpu.memory_space<vmem>>, vector<8x512xf32>,
    %c0_122 = arith.constant 0 : index
    %c0_123 = arith.constant 0 : index
    %112 = vector.load %arg5[%c0_122, %c0_123] : memref<8x72xf32, #tpu.memory_space<vmem>>, vector<8x72xf32>
    %c0_124 = arith.constant 0 : index
    %c0_125 = arith.constant 0 : index
    %113 = vector.load %arg7[%c0_124, %c0_125] : memref<72x512xf32, #tpu.memory_space<vmem>>, vector<72x512xf32>
    %cst_126 = arith.constant dense<0.000000e+00> : vector<8x512xf32>
    %114 = tpu.matmul %112, %113, %cst_126 {dimension_numbers = #tpu.dot_dimension_numbers<[1], [0], [0], [1], [0, 0, 1, 1], [], []>} : vector<8x72xf32>, vector<72x512xf32>, vector<8x512xf32> -> vector<8x512xf32>
    %cst_127 = arith.constant 1.000000e-01 : f32
    %115 = vector.broadcast %cst_127 : f32 to vector<8x512xf32>
    %116 = arith.mulf %115, %114 : vector<8x512xf32>
    %117 = arith.maximumf %114, %116 : vector<8x512xf32>
    %c0_128 = arith.constant 0 : index
    %c0_129 = arith.constant 0 : index
    %118 = vector.load %arg6[%c0_128, %c0_129] : memref<8x512xf32, #tpu.memory_space<vmem>>, vector<8x512xf32>
    tpu.vector_store %arg6[%c0_128, %c0_129], %117 {strides = array<i32>} : memref<8x512xf32, #tpu.memory_space<vmem>>, vector<8x512xf32>,
    return
  }
  func.func @transform_0(%arg0: i32) -> (i32, i32) {
    %c0_i32 = arith.constant 0 : i32
    %c0_i32_0 = arith.constant 0 : i32
    %c0_i32_1 = arith.constant 0 : i32
    return %c0_i32, %c0_i32_0 : i32, i32
  }
  func.func @transform_1(%arg0: i32) -> (i32, i32) {
    %c0_i32 = arith.constant 0 : i32
    %c0_i32_0 = arith.constant 0 : i32
    %c0_i32_1 = arith.constant 0 : i32
    return %c0_i32, %c0_i32_0 : i32, i32
  }
  func.func @transform_2(%arg0: i32) -> (i32, i32) {
    %c0_i32 = arith.constant 0 : i32
    %c0_i32_0 = arith.constant 0 : i32
    %c0_i32_1 = arith.constant 0 : i32
    return %c0_i32, %c0_i32_0 : i32, i32
  }
  func.func @transform_3(%arg0: i32) -> (i32, i32) {
    %c0_i32 = arith.constant 0 : i32
    %c0_i32_0 = arith.constant 0 : i32
    %c0_i32_1 = arith.constant 0 : i32
    return %c0_i32, %c0_i32_0 : i32, i32
  }
  func.func @transform_4(%arg0: i32) -> (i32, i32) {
    %c0_i32 = arith.constant 0 : i32
    %c0_i32_0 = arith.constant 0 : i32
    %c0_i32_1 = arith.constant 0 : i32
    return %c0_i32, %c0_i32_0 : i32, i32
  }
  func.func @transform_5(%arg0: i32) -> (i32, i32) {
    %c0_i32 = arith.constant 0 : i32
    %c0_i32_0 = arith.constant 0 : i32
    %c0_i32_1 = arith.constant 0 : i32
    return %c0_i32, %c0_i32_0 : i32, i32
  }
}

</mosaic_0001>

<llo_original>
// kernel: tpu_custom_call.1
$region0: #{tpu_custom_call.1}
  #allocation0 [shape = 'u32[]', space=smem, size = 0x4, offset = 0x4, fixed_abs, tag = 'smem constant byte address 0x4 - core index']
  #allocation1 [shape = 'u32[144,128]{1,0:T(1,128)}', space=vmem, size = 0x12000, scoped, tag = 'internal scratch']
  #allocation2 [shape = 'f32[72,512]{1,0:T(8,128)}', space=vmem, size = 0x24000, scoped, tag = 'scratch operand']
  %s0 = inlined_call_operand.hbm [shape: f32[8,512], index: 0, kind: input, shape index: {}]
  %s1 = inlined_call_operand.hbm [shape: f32[72,512], index: 1, kind: input, shape index: {}]
  %s2 = inlined_call_operand.hbm [shape: f32[8,72], index: 2, kind: input, shape index: {}]
  %s3 = inlined_call_operand.vmem [shape: f32[8,72], index: 3, kind: input, shape index: {}]
  %s4 = inlined_call_operand.hbm [shape: f32[8,72], index: 4, kind: input, shape index: {}]
  %s5 = inlined_call_operand.hbm [shape: f32[8,512], index: 5, kind: output, shape index: {}]
  %s6 = sld [smem:[#allocation0]]
  $region46: #{tpu_custom_call.1} parent=0
    _
  %s8 = ssub.s32 1, %s6
  %s9 = scalar_select 0, %s8, %s6
  $region1: #{tpu_custom_call.1} parent=0
    #allocation3 [shape = 'u8[16384]{0}', space=vmem, size = 0x4000, scoped, tag = 'input window, operand 0, single buffered']
    #allocation4 [shape = 's32[1]{0}', space=sflag, size = 0x4, scoped, tag = 'scoped memory for tpu_custom_call.1']
    #allocation5 [shape = 's32[1]{0}', space=sflag, size = 0x4, scoped, tag = 'scoped memory for tpu_custom_call.1']
    #allocation6 [shape = 'u8[147456]{0}', space=vmem, size = 0x24000, scoped, tag = 'input window, operand 1, single buffered']
    #allocation7 [shape = 's32[1]{0}', space=sflag, size = 0x4, scoped, tag = 'scoped memory for tpu_custom_call.1']
    #allocation8 [shape = 'u8[4096]{0}', space=vmem, size = 0x1000, scoped, tag = 'input window, operand 2, single buffered']
    #allocation9 [shape = 'u8[4096]{0}', space=vmem, size = 0x1000, scoped, tag = 'input window, operand 4, single buffered']
    #allocation10 [shape = 's32[1]{0}', space=sflag, size = 0x4, scoped, tag = 'scoped memory for tpu_custom_call.1']
    #allocation11 [shape = 'u8[16384]{0}', space=vmem, size = 0x4000, scoped, tag = 'output window, operand 0, single buffered']
    %10 = vsyncpa [#allocation4], 0
    %11 = vsyncpa [#allocation7], 0
    %12 = vsyncpa [#allocation10], 0
    %13 = vsyncpa [#allocation5], 0
    // Predicated region
    $region2: #{tpu_custom_call.1} parent=1 // pred_check
      _
    $region3: #{tpu_custom_call.1} parent=1 // pred_check_branch
      %15 = sbr.rel (0) target = $region5
    $region4: #{tpu_custom_call.1} parent=1 // pred_region
      %s17 = ssub.s32 512, 512
      %18 = vsyncadd [#allocation4], %s17
      %s20 = sshll.u32 [#allocation3], 4
      %s21 = int_to_ptr.vmem [resolvable:$true] %s20
      %23 = dma.hbm_to_vmem [thread:$0]  %s0, 512, %s21, [#allocation4]
    $region5: #{tpu_custom_call.1} parent=1 // pred_fallthru
      _
    // Predicated region
    $region6: #{tpu_custom_call.1} parent=1 // pred_check
      _
    $region7: #{tpu_custom_call.1} parent=1 // pred_check_branch
      %25 = sbr.rel (0) target = $region9
    $region8: #{tpu_custom_call.1} parent=1 // pred_region
      %s27 = ssub.s32 4608, 4608
      %28 = vsyncadd [#allocation7], %s27
      %s29 = sshll.u32 [#allocation6], 4
      %s30 = int_to_ptr.vmem [resolvable:$true] %s29
      %35 = dma.hbm_to_vmem [thread:$0]  %s1, 4608, %s30, [#allocation7], 512, 512, 32
    $region9: #{tpu_custom_call.1} parent=1 // pred_fallthru
      _
    // Predicated region
    $region10: #{tpu_custom_call.1} parent=1 // pred_check
      _
    $region11: #{tpu_custom_call.1} parent=1 // pred_check_branch
      %37 = sbr.rel (0) target = $region13
    $region12: #{tpu_custom_call.1} parent=1 // pred_region
      %s39 = ssub.s32 128, 128
      %40 = vsyncadd [#allocation7], %s39
      %s42 = sshll.u32 [#allocation8], 4
      %s43 = int_to_ptr.vmem [resolvable:$true] %s42
      %45 = dma.hbm_to_vmem [thread:$0]  %s2, 128, %s43, [#allocation7]
    $region13: #{tpu_custom_call.1} parent=1 // pred_fallthru
      _
    // Predicated region
    $region14: #{tpu_custom_call.1} parent=1 // pred_check
      _
    $region15: #{tpu_custom_call.1} parent=1 // pred_check_branch
      %47 = sbr.rel (0) target = $region17
    $region16: #{tpu_custom_call.1} parent=1 // pred_region
      _
    $region17: #{tpu_custom_call.1} parent=1 // pred_fallthru
      _
    // Predicated region
    $region18: #{tpu_custom_call.1} parent=1 // pred_check
      _
    $region19: #{tpu_custom_call.1} parent=1 // pred_check_branch
      %49 = sbr.rel (0) target = $region21
    $region20: #{tpu_custom_call.1} parent=1 // pred_region
      %s51 = ssub.s32 128, 128
      %52 = vsyncadd [#allocation10], %s51
      %s54 = sshll.u32 [#allocation9], 4
      %s55 = int_to_ptr.vmem [resolvable:$true] %s54
      %57 = dma.hbm_to_vmem [thread:$0]  %s4, 128, %s55, [#allocation10]
    $region21: #{tpu_custom_call.1} parent=1 // pred_fallthru
      _
    // Predicated region
    $region22: #{tpu_custom_call.1} parent=1 // pred_check
      _
    $region23: #{tpu_custom_call.1} parent=1 // pred_check_branch
      %59 = sbr.rel (0) target = $region25
    $region24: #{tpu_custom_call.1} parent=1 // pred_region
      %60 = dma.done [#allocation4], 512
    $region25: #{tpu_custom_call.1} parent=1 // pred_fallthru
      _
    // Predicated region
    $region26: #{tpu_custom_call.1} parent=1 // pred_check
      _
    $region27: #{tpu_custom_call.1} parent=1 // pred_check_branch
      %62 = sbr.rel (0) target = $region29
    $region28: #{tpu_custom_call.1} parent=1 // pred_region
      %63 = dma.done [#allocation7], 4608
    $region29: #{tpu_custom_call.1} parent=1 // pred_fallthru
      _
    // Predicated region
    $region30: #{tpu_custom_call.1} parent=1 // pred_check
      _
    $region31: #{tpu_custom_call.1} parent=1 // pred_check_branch
      %65 = sbr.rel (0) target = $region33
    $region32: #{tpu_custom_call.1} parent=1 // pred_region
      %66 = dma.done [#allocation7], 128
    $region33: #{tpu_custom_call.1} parent=1 // pred_fallthru
      _
    // Predicated region
    $region34: #{tpu_custom_call.1} parent=1 // pred_check
      _
    $region35: #{tpu_custom_call.1} parent=1 // pred_check_branch
      %68 = sbr.rel (0) target = $region37
    $region36: #{tpu_custom_call.1} parent=1 // pred_region
      %69 = dma.done [#allocation10], 128
    $region37: #{tpu_custom_call.1} parent=1 // pred_fallthru
      _
    %v70 = vld [vmem:[#allocation3] sm:$0xff]
    %v71 = vld [vmem:[#allocation3 + $0x8] sm:$0xff]
    %v72 = vld [vmem:[#allocation3 + $0x10] sm:$0xff]
    %v73 = vld [vmem:[#allocation3 + $0x18] sm:$0xff]
    %74 = vrot.lane.b32.xlu0 %v70, 17
    %v75 = vpop.permute.xlu0 %74
    %76 = vrot.lane.b32.xlu0 %v71, 17
    %v77 = vpop.permute.xlu0 %76
    %78 = vrot.lane.b32.xlu0 %v72, 17
    %v79 = vpop.permute.xlu0 %78
    %80 = vrot.lane.b32.xlu0 %v73, 17
    %v81 = vpop.permute.xlu0 %80
    %v82 = vlaneseq
    %v83 = vand.u32 %v82, 127
    %vm84 = vcmp.lt.s32.totalorder %v83, 17
    %v85 = vsel %vm84, %v79, %v81
    %v86 = vsel %vm84, %v77, %v79
    %v87 = vsel %vm84, %v75, %v77
    %v88 = vsel %vm84, %v81, %v75
    %v89 = vld [vmem:[#allocation6] sm:$0xff]
    %v90 = vld [vmem:[#allocation6 + $0x8] sm:$0xff]
    %v91 = vld [vmem:[#allocation6 + $0x10] sm:$0xff]
    %v92 = vld [vmem:[#allocation6 + $0x18] sm:$0xff]
    %v93 = vmul.f32 %v88, %v89
    %v94 = vmul.f32 %v87, %v90
    %v95 = vmul.f32 %v86, %v91
    %v96 = vmul.f32 %v85, %v92
    %97 = vst [vmem:[#allocation2] sm:$0xff] %v93
    %98 = vst [vmem:[#allocation2 + $0x8] sm:$0xff] %v94
    %99 = vst [vmem:[#allocation2 + $0x10] sm:$0xff] %v95
    %100 = vst [vmem:[#allocation2 + $0x18] sm:$0xff] %v96
    %101 = vrot.lane.b32.xlu0 %v70, 16
    %v102 = vpop.permute.xlu0 %101
    %103 = vrot.lane.b32.xlu0 %v71, 16
    %v104 = vpop.permute.xlu0 %103
    %105 = vrot.lane.b32.xlu0 %v72, 16
    %v106 = vpop.permute.xlu0 %105
    %107 = vrot.lane.b32.xlu0 %v73, 16
    %v108 = vpop.permute.xlu0 %107
    %vm109 = vcmp.lt.s32.totalorder %v83, 16
    %v110 = vsel %vm109, %v106, %v108
    %v111 = vsel %vm109, %v104, %v106
    %v112 = vsel %vm109, %v102, %v104
    %v113 = vsel %vm109, %v108, %v102
    %v114 = vld [vmem:[#allocation6 + $0x20] sm:$0xff]
    %v115 = vld [vmem:[#allocation6 + $0x28] sm:$0xff]
    %v116 = vld [vmem:[#allocation6 + $0x30] sm:$0xff]
    %v117 = vld [vmem:[#allocation6 + $0x38] sm:$0xff]
    %v118 = vmul.f32 %v113, %v114
    %v119 = vmul.f32 %v112, %v115
    %v120 = vmul.f32 %v111, %v116
    %v121 = vmul.f32 %v110, %v117
    %122 = vst [vmem:[#allocation2 + $0x20] sm:$0xff] %v118
    %123 = vst [vmem:[#allocation2 + $0x28] sm:$0xff] %v119
    %124 = vst [vmem:[#allocation2 + $0x30] sm:$0xff] %v120
    %125 = vst [vmem:[#allocation2 + $0x38] sm:$0xff] %v121
    %126 = vrot.lane.b32.xlu0 %v70, 15
    %v127 = vpop.permute.xlu0 %126
    %128 = vrot.lane.b32.xlu0 %v71, 15
    %v129 = vpop.permute.xlu0 %128
    %130 = vrot.lane.b32.xlu0 %v72, 15
    %v131 = vpop.permute.xlu0 %130
    %132 = vrot.lane.b32.xlu0 %v73, 15
    %v133 = vpop.permute.xlu0 %132
    %vm134 = vcmp.lt.s32.totalorder %v83, 15
    %v135 = vsel %vm134, %v131, %v133
    %v136 = vsel %vm134, %v129, %v131
    %v137 = vsel %vm134, %v127, %v129
    %v138 = vsel %vm134, %v133, %v127
    %v139 = vld [vmem:[#allocation6 + $0x40] sm:$0xff]
    %v140 = vld [vmem:[#allocation6 + $0x48] sm:$0xff]
    %v141 = vld [vmem:[#allocation6 + $0x50] sm:$0xff]
    %v142 = vld [vmem:[#allocation6 + $0x58] sm:$0xff]
    %v143 = vmul.f32 %v138, %v139
    %v144 = vmul.f32 %v137, %v140
    %v145 = vmul.f32 %v136, %v141
    %v146 = vmul.f32 %v135, %v142
    %147 = vst [vmem:[#allocation2 + $0x40] sm:$0xff] %v143
    %148 = vst [vmem:[#allocation2 + $0x48] sm:$0xff] %v144
    %149 = vst [vmem:[#allocation2 + $0x50] sm:$0xff] %v145
    %150 = vst [vmem:[#allocation2 + $0x58] sm:$0xff] %v146
    %151 = vrot.lane.b32.xlu0 %v70, 1
    %v152 = vpop.permute.xlu0 %151
    %153 = vrot.lane.b32.xlu0 %v71, 1
    %v154 = vpop.permute.xlu0 %153
    %155 = vrot.lane.b32.xlu0 %v72, 1
    %v156 = vpop.permute.xlu0 %155
    %157 = vrot.lane.b32.xlu0 %v73, 1
    %v158 = vpop.permute.xlu0 %157
    %vm159 = vcmp.lt.s32.totalorder %v83, 1
    %v160 = vsel %vm159, %v156, %v158
    %v161 = vsel %vm159, %v154, %v156
    %v162 = vsel %vm159, %v152, %v154
    %v163 = vsel %vm159, %v158, %v152
    %v164 = vld [vmem:[#allocation6 + $0x60] sm:$0xff]
    %v165 = vld [vmem:[#allocation6 + $0x68] sm:$0xff]
    %v166 = vld [vmem:[#allocation6 + $0x70] sm:$0xff]
    %v167 = vld [vmem:[#allocation6 + $0x78] sm:$0xff]
    %v168 = vmul.f32 %v163, %v164
    %v169 = vmul.f32 %v162, %v165
    %v170 = vmul.f32 %v161, %v166
    %v171 = vmul.f32 %v160, %v167
    %172 = vst [vmem:[#allocation2 + $0x60] sm:$0xff] %v168
    %173 = vst [vmem:[#allocation2 + $0x68] sm:$0xff] %v169
    %174 = vst [vmem:[#allocation2 + $0x70] sm:$0xff] %v170
    %175 = vst [vmem:[#allocation2 + $0x78] sm:$0xff] %v171
    %176 = vst [vmem:[#allocation2 + $0x80] sm:$0xff] %v70
    %177 = vst [vmem:[#allocation2 + $0x88] sm:$0xff] %v71
    %178 = vst [vmem:[#allocation2 + $0x90] sm:$0xff] %v72
    %179 = vst [vmem:[#allocation2 + $0x98] sm:$0xff] %v73
    %180 = vrot.lane.b32.xlu0 %v70, 127
    %v181 = vpop.permute.xlu0 %180
    %182 = vrot.lane.b32.xlu0 %v71, 127
    %v183 = vpop.permute.xlu0 %182
    %184 = vrot.lane.b32.xlu0 %v72, 127
    %v185 = vpop.permute.xlu0 %184
    %186 = vrot.lane.b32.xlu0 %v73, 127
    %v187 = vpop.permute.xlu0 %186
    %vm188 = vcmp.lt.s32.totalorder %v83, 127
    %v189 = vsel %vm188, %v185, %v187
    %v190 = vsel %vm188, %v183, %v185
    %v191 = vsel %vm188, %v181, %v183
    %v192 = vsel %vm188, %v187, %v181
    %v193 = vld [vmem:[#allocation6 + $0xa0] sm:$0xff]
    %v194 = vld [vmem:[#allocation6 + $0xa8] sm:$0xff]
    %v195 = vld [vmem:[#allocation6 + $0xb0] sm:$0xff]
    %v196 = vld [vmem:[#allocation6 + $0xb8] sm:$0xff]
    %v197 = vmul.f32 %v191, %v193
    %v198 = vmul.f32 %v190, %v194
    %v199 = vmul.f32 %v189, %v195
    %v200 = vmul.f32 %v192, %v196
    %201 = vst [vmem:[#allocation2 + $0xa0] sm:$0xff] %v197
    %202 = vst [vmem:[#allocation2 + $0xa8] sm:$0xff] %v198
    %203 = vst [vmem:[#allocation2 + $0xb0] sm:$0xff] %v199
    %204 = vst [vmem:[#allocation2 + $0xb8] sm:$0xff] %v200
    %205 = vrot.lane.b32.xlu0 %v70, 113
    %v206 = vpop.permute.xlu0 %205
    %207 = vrot.lane.b32.xlu0 %v71, 113
    %v208 = vpop.permute.xlu0 %207
    %209 = vrot.lane.b32.xlu0 %v72, 113
    %v210 = vpop.permute.xlu0 %209
    %211 = vrot.lane.b32.xlu0 %v73, 113
    %v212 = vpop.permute.xlu0 %211
    %vm213 = vcmp.lt.s32.totalorder %v83, 113
    %v214 = vsel %vm213, %v210, %v212
    %v215 = vsel %vm213, %v208, %v210
    %v216 = vsel %vm213, %v206, %v208
    %v217 = vsel %vm213, %v212, %v206
    %v218 = vld [vmem:[#allocation6 + $0xc0] sm:$0xff]
    %v219 = vld [vmem:[#allocation6 + $0xc8] sm:$0xff]
    %v220 = vld [vmem:[#allocation6 + $0xd0] sm:$0xff]
    %v221 = vld [vmem:[#allocation6 + $0xd8] sm:$0xff]
    %v222 = vmul.f32 %v216, %v218
    %v223 = vmul.f32 %v215, %v219
    %v224 = vmul.f32 %v214, %v220
    %v225 = vmul.f32 %v217, %v221
    %226 = vst [vmem:[#allocation2 + $0xc0] sm:$0xff] %v222
    %227 = vst [vmem:[#allocation2 + $0xc8] sm:$0xff] %v223
    %228 = vst [vmem:[#allocation2 + $0xd0] sm:$0xff] %v224
    %229 = vst [vmem:[#allocation2 + $0xd8] sm:$0xff] %v225
    %230 = vrot.lane.b32.xlu0 %v70, 112
    %v231 = vpop.permute.xlu0 %230
    %232 = vrot.lane.b32.xlu0 %v71, 112
    %v233 = vpop.permute.xlu0 %232
    %234 = vrot.lane.b32.xlu0 %v72, 112
    %v235 = vpop.permute.xlu0 %234
    %236 = vrot.lane.b32.xlu0 %v73, 112
    %v237 = vpop.permute.xlu0 %236
    %vm238 = vcmp.lt.s32.totalorder %v83, 112
    %v239 = vsel %vm238, %v235, %v237
    %v240 = vsel %vm238, %v233, %v235
    %v241 = vsel %vm238, %v231, %v233
    %v242 = vsel %vm238, %v237, %v231
    %v243 = vld [vmem:[#allocation6 + $0xe0] sm:$0xff]
    %v244 = vld [vmem:[#allocation6 + $0xe8] sm:$0xff]
    %v245 = vld [vmem:[#allocation6 + $0xf0] sm:$0xff]
    %v246 = vld [vmem:[#allocation6 + $0xf8] sm:$0xff]
    %v247 = vmul.f32 %v241, %v243
    %v248 = vmul.f32 %v240, %v244
    %v249 = vmul.f32 %v239, %v245
    %v250 = vmul.f32 %v242, %v246
    %251 = vst [vmem:[#allocation2 + $0xe0] sm:$0xff] %v247
    %252 = vst [vmem:[#allocation2 + $0xe8] sm:$0xff] %v248
    %253 = vst [vmem:[#allocation2 + $0xf0] sm:$0xff] %v249
    %254 = vst [vmem:[#allocation2 + $0xf8] sm:$0xff] %v250
    %255 = vrot.lane.b32.xlu0 %v70, 111
    %v256 = vpop.permute.xlu0 %255
    %257 = vrot.lane.b32.xlu0 %v71, 111
    %v258 = vpop.permute.xlu0 %257
    %259 = vrot.lane.b32.xlu0 %v72, 111
    %v260 = vpop.permute.xlu0 %259
    %261 = vrot.lane.b32.xlu0 %v73, 111
    %v262 = vpop.permute.xlu0 %261
    %vm263 = vcmp.lt.s32.totalorder %v83, 111
    %v264 = vsel %vm263, %v260, %v262
    %v265 = vsel %vm263, %v258, %v260
    %v266 = vsel %vm263, %v256, %v258
    %v267 = vsel %vm263, %v262, %v256
    %v268 = vld [vmem:[#allocation6 + $0x100] sm:$0xff]
    %v269 = vld [vmem:[#allocation6 + $0x108] sm:$0xff]
    %v270 = vld [vmem:[#allocation6 + $0x110] sm:$0xff]
    %v271 = vld [vmem:[#allocation6 + $0x118] sm:$0xff]
    %v272 = vmul.f32 %v266, %v268
    %v273 = vmul.f32 %v265, %v269
    %v274 = vmul.f32 %v264, %v270
    %v275 = vmul.f32 %v267, %v271
    %276 = vst [vmem:[#allocation2 + $0x100] sm:$0xff] %v272
    %277 = vst [vmem:[#allocation2 + $0x108] sm:$0xff] %v273
    %278 = vst [vmem:[#allocation2 + $0x110] sm:$0xff] %v274
    %279 = vst [vmem:[#allocation2 + $0x118] sm:$0xff] %v275
    %v280 = vld [vmem:[#allocation8] sm:$0xff]
    %v281 = vld [vmem:[#allocation2] sm:$0xff]
    %v282 = vld [vmem:[#allocation2 + $0x8] sm:$0xff]
    %v283 = vld [vmem:[#allocation2 + $0x10] sm:$0xff]
    %v284 = vld [vmem:[#allocation2 + $0x18] sm:$0xff]
    %v285 = vld [vmem:[#allocation2 + $0x20] sm:$0xff]
    %v286 = vld [vmem:[#allocation2 + $0x28] sm:$0xff]
    %v287 = vld [vmem:[#allocation2 + $0x30] sm:$0xff]
    %v288 = vld [vmem:[#allocation2 + $0x38] sm:$0xff]
    %v289 = vld [vmem:[#allocation2 + $0x40] sm:$0xff]
    %v290 = vld [vmem:[#allocation2 + $0x48] sm:$0xff]
    %v291 = vld [vmem:[#allocation2 + $0x50] sm:$0xff]
    %v292 = vld [vmem:[#allocation2 + $0x58] sm:$0xff]
    %v293 = vld [vmem:[#allocation2 + $0x60] sm:$0xff]
    %v294 = vld [vmem:[#allocation2 + $0x68] sm:$0xff]
    %v295 = vld [vmem:[#allocation2 + $0x70] sm:$0xff]
    %v296 = vld [vmem:[#allocation2 + $0x78] sm:$0xff]
    %v297 = vld [vmem:[#allocation2 + $0x80] sm:$0xff]
    %v298 = vld [vmem:[#allocation2 + $0x88] sm:$0xff]
    %v299 = vld [vmem:[#allocation2 + $0x90] sm:$0xff]
    %v300 = vld [vmem:[#allocation2 + $0x98] sm:$0xff]
    %v301 = vld [vmem:[#allocation2 + $0xa0] sm:$0xff]
    %v302 = vld [vmem:[#allocation2 + $0xa8] sm:$0xff]
    %v303 = vld [vmem:[#allocation2 + $0xb0] sm:$0xff]
    %v304 = vld [vmem:[#allocation2 + $0xb8] sm:$0xff]
    %v305 = vld [vmem:[#allocation2 + $0xc0] sm:$0xff]
    %v306 = vld [vmem:[#allocation2 + $0xc8] sm:$0xff]
    %v307 = vld [vmem:[#allocation2 + $0xd0] sm:$0xff]
    %v308 = vld [vmem:[#allocation2 + $0xd8] sm:$0xff]
    %v309 = vld [vmem:[#allocation2 + $0xe0] sm:$0xff]
    %v310 = vld [vmem:[#allocation2 + $0xe8] sm:$0xff]
    %v311 = vld [vmem:[#allocation2 + $0xf0] sm:$0xff]
    %v312 = vld [vmem:[#allocation2 + $0xf8] sm:$0xff]
    %v313 = vld [vmem:[#allocation2 + $0x100] sm:$0xff]
    %v314 = vld [vmem:[#allocation2 + $0x108] sm:$0xff]
    %v315 = vld [vmem:[#allocation2 + $0x110] sm:$0xff]
    %v316 = vld [vmem:[#allocation2 + $0x118] sm:$0xff]
    %vm317 = vcmask 588800
    %v319 = vsel %vm317, %v280, 0
    %321 = vmatprep.subr.mxu0 %v282
    %322 = vmatpush1.msra.mxu0 %v281
    %323 = vmatprep.subr.mxu0 %v286
    %324 = vmatpush1.msra.mxu0 %v285
    %325 = vmatprep.subr.mxu0 %v290
    %326 = vmatpush1.msra.mxu0 %v289
    %327 = vmatprep.subr.mxu0 %v294
    %328 = vmatpush1.msra.mxu0 %v293
    %329 = vmatprep.subr.mxu0 %v298
    %330 = vmatpush1.msra.mxu0 %v297
    %331 = vmatprep.subr.mxu0 %v302
    %332 = vmatpush1.msra.mxu0 %v301
    %333 = vmatprep.subr.mxu0 %v306
    %334 = vmatpush1.msra.mxu0 %v305
    %335 = vmatprep.subr.mxu0 %v310
    %336 = vmatpush1.msra.mxu0 %v309
    %337 = vmatprep.subr.mxu0 %v314
    %338 = vmatpush1.msra.mxu0 %v313
    %339 = vmatprep.subr.mxu0 0.0
    %340 = vmatpush1.msra.mxu0 0.0
    %341 = vmatprep.subr.mxu0 0.0
    %342 = vmatpush1.msra.mxu0 0.0
    %343 = vmatprep.subr.mxu0 0.0
    %344 = vmatpush1.msra.mxu0 0.0
    %345 = vmatprep.subr.mxu0 0.0
    %346 = vmatpush1.msra.mxu0 0.0
    %347 = vmatprep.subr.mxu0 0.0
    %348 = vmatpush1.msra.mxu0 0.0
    %349 = vmatprep.subr.mxu0 0.0
    %350 = vmatpush1.msra.mxu0 0.0
    %351 = vmatprep.subr.mxu0 0.0
    %352 = vmatpush1.msra.mxu0 0.0
    %353 = vmatprep.subr.mxu0 0.0
    %354 = vmatpush1.msra.mxu0 0.0
    %355 = vmatprep.subr.mxu0 0.0
    %356 = vmatpush1.msra.mxu0 0.0
    %357 = vmatprep.subr.mxu0 0.0
    %358 = vmatpush1.msra.mxu0 0.0
    %359 = vmatprep.subr.mxu0 0.0
    %360 = vmatpush1.msra.mxu0 0.0
    %361 = vmatprep.subr.mxu0 0.0
    %362 = vmatpush1.msra.mxu0 0.0
    %363 = vmatprep.subr.mxu0 0.0
    %364 = vmatpush1.msra.mxu0 0.0
    %365 = vmatprep.subr.mxu0 0.0
    %366 = vmatpush1.msra.mxu0 0.0
    %367 = vmatprep.subr.mxu0 0.0
    %368 = vmatpush1.msra.mxu0 0.0
    %369 = vmatprep.subr.mxu0 0.0
    %370 = vmatpush1.msra.mxu0 0.0
    %371 = vmatprep.subr.mxu0 0.0
    %372 = vmatpush1.msra.mxu0 0.0
    %373 = vmatprep.subr.mxu0 0.0
    %374 = vmatpush1.msra.mxu0 0.0
    %375 = vmatprep.subr.mxu0 0.0
    %376 = vmatpush1.msra.mxu0 0.0
    %377 = vmatprep.subr.mxu0 0.0
    %378 = vmatpush1.msra.mxu0 0.0
    %379 = vmatprep.subr.mxu0 0.0
    %380 = vmatpush1.msra.mxu0 0.0
    %381 = vmatprep.subr.mxu0 0.0
    %382 = vmatpush1.msra.mxu0 0.0
    %383 = vmatprep.subr.mxu0 0.0
    %384 = vmatpush1.msra.mxu0 0.0
    %385 = vmatprep.mubr.f32.mxu0 0.0
    %386 = vmatmul.mubr.f32.gmra.mrb[0].mxu0 %v319
    %v387 = vpop.f32.mrb[0].mxu0
    %v388 = vadd.f32 0.0, %v387
    %v389 = vpop.f32.mrb[0].mxu0
    %v390 = vadd.f32 0.0, %v389
    %391 = vdwg.mxu0
    %392 = vmatprep.subr.mxu0 %v284
    %393 = vmatpush1.msra.mxu0 %v283
    %394 = vmatprep.subr.mxu0 %v288
    %395 = vmatpush1.msra.mxu0 %v287
    %396 = vmatprep.subr.mxu0 %v292
    %397 = vmatpush1.msra.mxu0 %v291
    %398 = vmatprep.subr.mxu0 %v296
    %399 = vmatpush1.msra.mxu0 %v295
    %400 = vmatprep.subr.mxu0 %v300
    %401 = vmatpush1.msra.mxu0 %v299
    %402 = vmatprep.subr.mxu0 %v304
    %403 = vmatpush1.msra.mxu0 %v303
    %404 = vmatprep.subr.mxu0 %v308
    %405 = vmatpush1.msra.mxu0 %v307
    %406 = vmatprep.subr.mxu0 %v312
    %407 = vmatpush1.msra.mxu0 %v311
    %408 = vmatprep.subr.mxu0 %v316
    %409 = vmatpush1.msra.mxu0 %v315
    %410 = vmatprep.subr.mxu0 0.0
    %411 = vmatpush1.msra.mxu0 0.0
    %412 = vmatprep.subr.mxu0 0.0
    %413 = vmatpush1.msra.mxu0 0.0
    %414 = vmatprep.subr.mxu0 0.0
    %415 = vmatpush1.msra.mxu0 0.0
    %416 = vmatprep.subr.mxu0 0.0
    %417 = vmatpush1.msra.mxu0 0.0
    %418 = vmatprep.subr.mxu0 0.0
    %419 = vmatpush1.msra.mxu0 0.0
    %420 = vmatprep.subr.mxu0 0.0
    %421 = vmatpush1.msra.mxu0 0.0
    %422 = vmatprep.subr.mxu0 0.0
    %423 = vmatpush1.msra.mxu0 0.0
    %424 = vmatprep.subr.mxu0 0.0
    %425 = vmatpush1.msra.mxu0 0.0
    %426 = vmatprep.subr.mxu0 0.0
    %427 = vmatpush1.msra.mxu0 0.0
    %428 = vmatprep.subr.mxu0 0.0
    %429 = vmatpush1.msra.mxu0 0.0
    %430 = vmatprep.subr.mxu0 0.0
    %431 = vmatpush1.msra.mxu0 0.0
    %432 = vmatprep.subr.mxu0 0.0
    %433 = vmatpush1.msra.mxu0 0.0
    %434 = vmatprep.subr.mxu0 0.0
    %435 = vmatpush1.msra.mxu0 0.0
    %436 = vmatprep.subr.mxu0 0.0
    %437 = vmatpush1.msra.mxu0 0.0
    %438 = vmatprep.subr.mxu0 0.0
    %439 = vmatpush1.msra.mxu0 0.0
    %440 = vmatprep.subr.mxu0 0.0
    %441 = vmatpush1.msra.mxu0 0.0
    %442 = vmatprep.subr.mxu0 0.0
    %443 = vmatpush1.msra.mxu0 0.0
    %444 = vmatprep.subr.mxu0 0.0
    %445 = vmatpush1.msra.mxu0 0.0
    %446 = vmatprep.subr.mxu0 0.0
    %447 = vmatpush1.msra.mxu0 0.0
    %448 = vmatprep.subr.mxu0 0.0
    %449 = vmatpush1.msra.mxu0 0.0
    %450 = vmatprep.subr.mxu0 0.0
    %451 = vmatpush1.msra.mxu0 0.0
    %452 = vmatprep.subr.mxu0 0.0
    %453 = vmatpush1.msra.mxu0 0.0
    %454 = vmatprep.subr.mxu0 0.0
    %455 = vmatpush1.msra.mxu0 0.0
    %456 = vmatprep.mubr.f32.mxu0 0.0
    %457 = vmatmul.mubr.f32.gmra.mrb[0].mxu0 %v319
    %v458 = vpop.f32.mrb[0].mxu0
    %v459 = vadd.f32 0.0, %v458
    %v460 = vpop.f32.mrb[0].mxu0
    %v461 = vadd.f32 0.0, %v460
    %462 = vdwg.mxu0
    %v463 = vmul.f32 %v388, 0.1
    %v464 = vmul.f32 %v390, 0.1
    %v465 = vmul.f32 %v459, 0.1
    %v466 = vmul.f32 %v461, 0.1
    %v467 = vmax.f32 %v388, %v463
    %v468 = vmax.f32 %v390, %v464
    %v469 = vmax.f32 %v459, %v465
    %v470 = vmax.f32 %v461, %v466
    %471 = vrot.lane.b32.xlu0 %v467, 17
    %v472 = vpop.permute.xlu0 %471
    %473 = vrot.lane.b32.xlu0 %v468, 17
    %v474 = vpop.permute.xlu0 %473
    %475 = vrot.lane.b32.xlu0 %v469, 17
    %v476 = vpop.permute.xlu0 %475
    %477 = vrot.lane.b32.xlu0 %v470, 17
    %v478 = vpop.permute.xlu0 %477
    %v479 = vsel %vm84, %v476, %v478
    %v480 = vsel %vm84, %v474, %v476
    %v481 = vsel %vm84, %v472, %v474
    %v482 = vsel %vm84, %v478, %v472
    %v483 = vld [vmem:[#allocation6] sm:$0xff]
    %v484 = vld [vmem:[#allocation6 + $0x8] sm:$0xff]
    %v485 = vld [vmem:[#allocation6 + $0x10] sm:$0xff]
    %v486 = vld [vmem:[#allocation6 + $0x18] sm:$0xff]
    %v487 = vmul.f32 %v482, %v483
    %v488 = vmul.f32 %v481, %v484
    %v489 = vmul.f32 %v480, %v485
    %v490 = vmul.f32 %v479, %v486
    %491 = vst [vmem:[#allocation2] sm:$0xff] %v487
    %492 = vst [vmem:[#allocation2 + $0x8] sm:$0xff] %v488
    %493 = vst [vmem:[#allocation2 + $0x10] sm:$0xff] %v489
    %494 = vst [vmem:[#allocation2 + $0x18] sm:$0xff] %v490
    %495 = vrot.lane.b32.xlu0 %v467, 16
    %v496 = vpop.permute.xlu0 %495
    %497 = vrot.lane.b32.xlu0 %v468, 16
    %v498 = vpop.permute.xlu0 %497
    %499 = vrot.lane.b32.xlu0 %v469, 16
    %v500 = vpop.permute.xlu0 %499
    %501 = vrot.lane.b32.xlu0 %v470, 16
    %v502 = vpop.permute.xlu0 %501
    %v503 = vsel %vm109, %v500, %v502
    %v504 = vsel %vm109, %v498, %v500
    %v505 = vsel %vm109, %v496, %v498
    %v506 = vsel %vm109, %v502, %v496
    %v507 = vld [vmem:[#allocation6 + $0x20] sm:$0xff]
    %v508 = vld [vmem:[#allocation6 + $0x28] sm:$0xff]
    %v509 = vld [vmem:[#allocation6 + $0x30] sm:$0xff]
    %v510 = vld [vmem:[#allocation6 + $0x38] sm:$0xff]
    %v511 = vmul.f32 %v506, %v507
    %v512 = vmul.f32 %v505, %v508
    %v513 = vmul.f32 %v504, %v509
    %v514 = vmul.f32 %v503, %v510
    %515 = vst [vmem:[#allocation2 + $0x20] sm:$0xff] %v511
    %516 = vst [vmem:[#allocation2 + $0x28] sm:$0xff] %v512
    %517 = vst [vmem:[#allocation2 + $0x30] sm:$0xff] %v513
    %518 = vst [vmem:[#allocation2 + $0x38] sm:$0xff] %v514
    %519 = vrot.lane.b32.xlu0 %v467, 15
    %v520 = vpop.permute.xlu0 %519
    %521 = vrot.lane.b32.xlu0 %v468, 15
    %v522 = vpop.permute.xlu0 %521
    %523 = vrot.lane.b32.xlu0 %v469, 15
    %v524 = vpop.permute.xlu0 %523
    %525 = vrot.lane.b32.xlu0 %v470, 15
    %v526 = vpop.permute.xlu0 %525
    %v527 = vsel %vm134, %v524, %v526
    %v528 = vsel %vm134, %v522, %v524
    %v529 = vsel %vm134, %v520, %v522
    %v530 = vsel %vm134, %v526, %v520
    %v531 = vld [vmem:[#allocation6 + $0x40] sm:$0xff]
    %v532 = vld [vmem:[#allocation6 + $0x48] sm:$0xff]
    %v533 = vld [vmem:[#allocation6 + $0x50] sm:$0xff]
    %v534 = vld [vmem:[#allocation6 + $0x58] sm:$0xff]
    %v535 = vmul.f32 %v530, %v531
    %v536 = vmul.f32 %v529, %v532
    %v537 = vmul.f32 %v528, %v533
    %v538 = vmul.f32 %v527, %v534
    %539 = vst [vmem:[#allocation2 + $0x40] sm:$0xff] %v535
    %540 = vst [vmem:[#allocation2 + $0x48] sm:$0xff] %v536
    %541 = vst [vmem:[#allocation2 + $0x50] sm:$0xff] %v537
    %542 = vst [vmem:[#allocation2 + $0x58] sm:$0xff] %v538
    %543 = vrot.lane.b32.xlu0 %v467, 1
    %v544 = vpop.permute.xlu0 %543
    %545 = vrot.lane.b32.xlu0 %v468, 1
    %v546 = vpop.permute.xlu0 %545
    %547 = vrot.lane.b32.xlu0 %v469, 1
    %v548 = vpop.permute.xlu0 %547
    %549 = vrot.lane.b32.xlu0 %v470, 1
    %v550 = vpop.permute.xlu0 %549
    %v551 = vsel %vm159, %v548, %v550
    %v552 = vsel %vm159, %v546, %v548
    %v553 = vsel %vm159, %v544, %v546
    %v554 = vsel %vm159, %v550, %v544
    %v555 = vld [vmem:[#allocation6 + $0x60] sm:$0xff]
    %v556 = vld [vmem:[#allocation6 + $0x68] sm:$0xff]
    %v557 = vld [vmem:[#allocation6 + $0x70] sm:$0xff]
    %v558 = vld [vmem:[#allocation6 + $0x78] sm:$0xff]
    %v559 = vmul.f32 %v554, %v555
    %v560 = vmul.f32 %v553, %v556
    %v561 = vmul.f32 %v552, %v557
    %v562 = vmul.f32 %v551, %v558
    %563 = vst [vmem:[#allocation2 + $0x60] sm:$0xff] %v559
    %564 = vst [vmem:[#allocation2 + $0x68] sm:$0xff] %v560
    %565 = vst [vmem:[#allocation2 + $0x70] sm:$0xff] %v561
    %566 = vst [vmem:[#allocation2 + $0x78] sm:$0xff] %v562
    %567 = vst [vmem:[#allocation2 + $0x80] sm:$0xff] %v467
    %568 = vst [vmem:[#allocation2 + $0x88] sm:$0xff] %v468
    %569 = vst [vmem:[#allocation2 + $0x90] sm:$0xff] %v469
    %570 = vst [vmem:[#allocation2 + $0x98] sm:$0xff] %v470
    %571 = vrot.lane.b32.xlu0 %v467, 127
    %v572 = vpop.permute.xlu0 %571
    %573 = vrot.lane.b32.xlu0 %v468, 127
    %v574 = vpop.permute.xlu0 %573
    %575 = vrot.lane.b32.xlu0 %v469, 127
    %v576 = vpop.permute.xlu0 %575
    %577 = vrot.lane.b32.xlu0 %v470, 127
    %v578 = vpop.permute.xlu0 %577
    %v579 = vsel %vm188, %v576, %v578
    %v580 = vsel %vm188, %v574, %v576
    %v581 = vsel %vm188, %v572, %v574
    %v582 = vsel %vm188, %v578, %v572
    %v583 = vld [vmem:[#allocation6 + $0xa0] sm:$0xff]
    %v584 = vld [vmem:[#allocation6 + $0xa8] sm:$0xff]
    %v585 = vld [vmem:[#allocation6 + $0xb0] sm:$0xff]
    %v586 = vld [vmem:[#allocation6 + $0xb8] sm:$0xff]
    %v587 = vmul.f32 %v581, %v583
    %v588 = vmul.f32 %v580, %v584
    %v589 = vmul.f32 %v579, %v585
    %v590 = vmul.f32 %v582, %v586
    %591 = vst [vmem:[#allocation2 + $0xa0] sm:$0xff] %v587
    %592 = vst [vmem:[#allocation2 + $0xa8] sm:$0xff] %v588
    %593 = vst [vmem:[#allocation2 + $0xb0] sm:$0xff] %v589
    %594 = vst [vmem:[#allocation2 + $0xb8] sm:$0xff] %v590
    %595 = vrot.lane.b32.xlu0 %v467, 113
    %v596 = vpop.permute.xlu0 %595
    %597 = vrot.lane.b32.xlu0 %v468, 113
    %v598 = vpop.permute.xlu0 %597
    %599 = vrot.lane.b32.xlu0 %v469, 113
    %v600 = vpop.permute.xlu0 %599
    %601 = vrot.lane.b32.xlu0 %v470, 113
    %v602 = vpop.permute.xlu0 %601
    %v603 = vsel %vm213, %v600, %v602
    %v604 = vsel %vm213, %v598, %v600
    %v605 = vsel %vm213, %v596, %v598
    %v606 = vsel %vm213, %v602, %v596
    %v607 = vld [vmem:[#allocation6 + $0xc0] sm:$0xff]
    %v608 = vld [vmem:[#allocation6 + $0xc8] sm:$0xff]
    %v609 = vld [vmem:[#allocation6 + $0xd0] sm:$0xff]
    %v610 = vld [vmem:[#allocation6 + $0xd8] sm:$0xff]
    %v611 = vmul.f32 %v605, %v607
    %v612 = vmul.f32 %v604, %v608
    %v613 = vmul.f32 %v603, %v609
    %v614 = vmul.f32 %v606, %v610
    %615 = vst [vmem:[#allocation2 + $0xc0] sm:$0xff] %v611
    %616 = vst [vmem:[#allocation2 + $0xc8] sm:$0xff] %v612
    %617 = vst [vmem:[#allocation2 + $0xd0] sm:$0xff] %v613
    %618 = vst [vmem:[#allocation2 + $0xd8] sm:$0xff] %v614
    %619 = vrot.lane.b32.xlu0 %v467, 112
    %v620 = vpop.permute.xlu0 %619
    %621 = vrot.lane.b32.xlu0 %v468, 112
    %v622 = vpop.permute.xlu0 %621
    %623 = vrot.lane.b32.xlu0 %v469, 112
    %v624 = vpop.permute.xlu0 %623
    %625 = vrot.lane.b32.xlu0 %v470, 112
    %v626 = vpop.permute.xlu0 %625
    %v627 = vsel %vm238, %v624, %v626
    %v628 = vsel %vm238, %v622, %v624
    %v629 = vsel %vm238, %v620, %v622
    %v630 = vsel %vm238, %v626, %v620
    %v631 = vld [vmem:[#allocation6 + $0xe0] sm:$0xff]
    %v632 = vld [vmem:[#allocation6 + $0xe8] sm:$0xff]
    %v633 = vld [vmem:[#allocation6 + $0xf0] sm:$0xff]
    %v634 = vld [vmem:[#allocation6 + $0xf8] sm:$0xff]
    %v635 = vmul.f32 %v629, %v631
    %v636 = vmul.f32 %v628, %v632
    %v637 = vmul.f32 %v627, %v633
    %v638 = vmul.f32 %v630, %v634
    %639 = vst [vmem:[#allocation2 + $0xe0] sm:$0xff] %v635
    %640 = vst [vmem:[#allocation2 + $0xe8] sm:$0xff] %v636
    %641 = vst [vmem:[#allocation2 + $0xf0] sm:$0xff] %v637
    %642 = vst [vmem:[#allocation2 + $0xf8] sm:$0xff] %v638
    %643 = vrot.lane.b32.xlu0 %v467, 111
    %v644 = vpop.permute.xlu0 %643
    %645 = vrot.lane.b32.xlu0 %v468, 111
    %v646 = vpop.permute.xlu0 %645
    %647 = vrot.lane.b32.xlu0 %v469, 111
    %v648 = vpop.permute.xlu0 %647
    %649 = vrot.lane.b32.xlu0 %v470, 111
    %v650 = vpop.permute.xlu0 %649
    %v651 = vsel %vm263, %v648, %v650
    %v652 = vsel %vm263, %v646, %v648
    %v653 = vsel %vm263, %v644, %v646
    %v654 = vsel %vm263, %v650, %v644
    %v655 = vld [vmem:[#allocation6 + $0x100] sm:$0xff]
    %v656 = vld [vmem:[#allocation6 + $0x108] sm:$0xff]
    %v657 = vld [vmem:[#allocation6 + $0x110] sm:$0xff]
    %v658 = vld [vmem:[#allocation6 + $0x118] sm:$0xff]
    %v659 = vmul.f32 %v653, %v655
    %v660 = vmul.f32 %v652, %v656
    %v661 = vmul.f32 %v651, %v657
    %v662 = vmul.f32 %v654, %v658
    %663 = vst [vmem:[#allocation2 + $0x100] sm:$0xff] %v659
    %664 = vst [vmem:[#allocation2 + $0x108] sm:$0xff] %v660
    %665 = vst [vmem:[#allocation2 + $0x110] sm:$0xff] %v661
    %666 = vst [vmem:[#allocation2 + $0x118] sm:$0xff] %v662
    %v667 = vld [vmem:[%s3] sm:$0xff]
    %v668 = vld [vmem:[#allocation2] sm:$0xff]
    %v669 = vld [vmem:[#allocation2 + $0x8] sm:$0xff]
    %v670 = vld [vmem:[#allocation2 + $0x10] sm:$0xff]
    %v671 = vld [vmem:[#allocation2 + $0x18] sm:$0xff]
    %v672 = vld [vmem:[#allocation2 + $0x20] sm:$0xff]
    %v673 = vld [vmem:[#allocation2 + $0x28] sm:$0xff]
    %v674 = vld [vmem:[#allocation2 + $0x30] sm:$0xff]
    %v675 = vld [vmem:[#allocation2 + $0x38] sm:$0xff]
    %v676 = vld [vmem:[#allocation2 + $0x40] sm:$0xff]
    %v677 = vld [vmem:[#allocation2 + $0x48] sm:$0xff]
    %v678 = vld [vmem:[#allocation2 + $0x50] sm:$0xff]
    %v679 = vld [vmem:[#allocation2 + $0x58] sm:$0xff]
    %v680 = vld [vmem:[#allocation2 + $0x60] sm:$0xff]
    %v681 = vld [vmem:[#allocation2 + $0x68] sm:$0xff]
    %v682 = vld [vmem:[#allocation2 + $0x70] sm:$0xff]
    %v683 = vld [vmem:[#allocation2 + $0x78] sm:$0xff]
    %v684 = vld [vmem:[#allocation2 + $0x80] sm:$0xff]
    %v685 = vld [vmem:[#allocation2 + $0x88] sm:$0xff]
    %v686 = vld [vmem:[#allocation2 + $0x90] sm:$0xff]
    %v687 = vld [vmem:[#allocation2 + $0x98] sm:$0xff]
    %v688 = vld [vmem:[#allocation2 + $0xa0] sm:$0xff]
    %v689 = vld [vmem:[#allocation2 + $0xa8] sm:$0xff]
    %v690 = vld [vmem:[#allocation2 + $0xb0] sm:$0xff]
    %v691 = vld [vmem:[#allocation2 + $0xb8] sm:$0xff]
    %v692 = vld [vmem:[#allocation2 + $0xc0] sm:$0xff]
    %v693 = vld [vmem:[#allocation2 + $0xc8] sm:$0xff]
    %v694 = vld [vmem:[#allocation2 + $0xd0] sm:$0xff]
    %v695 = vld [vmem:[#allocation2 + $0xd8] sm:$0xff]
    %v696 = vld [vmem:[#allocation2 + $0xe0] sm:$0xff]
    %v697 = vld [vmem:[#allocation2 + $0xe8] sm:$0xff]
    %v698 = vld [vmem:[#allocation2 + $0xf0] sm:$0xff]
    %v699 = vld [vmem:[#allocation2 + $0xf8] sm:$0xff]
    %v700 = vld [vmem:[#allocation2 + $0x100] sm:$0xff]
    %v701 = vld [vmem:[#allocation2 + $0x108] sm:$0xff]
    %v702 = vld [vmem:[#allocation2 + $0x110] sm:$0xff]
    %v703 = vld [vmem:[#allocation2 + $0x118] sm:$0xff]
    %v705 = vsel %vm317, %v667, 0
    %707 = vmatprep.subr.mxu0 %v669
    %708 = vmatpush1.msra.mxu0 %v668
    %709 = vmatprep.subr.mxu0 %v673
    %710 = vmatpush1.msra.mxu0 %v672
    %711 = vmatprep.subr.mxu0 %v677
    %712 = vmatpush1.msra.mxu0 %v676
    %713 = vmatprep.subr.mxu0 %v681
    %714 = vmatpush1.msra.mxu0 %v680
    %715 = vmatprep.subr.mxu0 %v685
    %716 = vmatpush1.msra.mxu0 %v684
    %717 = vmatprep.subr.mxu0 %v689
    %718 = vmatpush1.msra.mxu0 %v688
    %719 = vmatprep.subr.mxu0 %v693
    %720 = vmatpush1.msra.mxu0 %v692
    %721 = vmatprep.subr.mxu0 %v697
    %722 = vmatpush1.msra.mxu0 %v696
    %723 = vmatprep.subr.mxu0 %v701
    %724 = vmatpush1.msra.mxu0 %v700
    %725 = vmatprep.subr.mxu0 0.0
    %726 = vmatpush1.msra.mxu0 0.0
    %727 = vmatprep.subr.mxu0 0.0
    %728 = vmatpush1.msra.mxu0 0.0
    %729 = vmatprep.subr.mxu0 0.0
    %730 = vmatpush1.msra.mxu0 0.0
    %731 = vmatprep.subr.mxu0 0.0
    %732 = vmatpush1.msra.mxu0 0.0
    %733 = vmatprep.subr.mxu0 0.0
    %734 = vmatpush1.msra.mxu0 0.0
    %735 = vmatprep.subr.mxu0 0.0
    %736 = vmatpush1.msra.mxu0 0.0
    %737 = vmatprep.subr.mxu0 0.0
    %738 = vmatpush1.msra.mxu0 0.0
    %739 = vmatprep.subr.mxu0 0.0
    %740 = vmatpush1.msra.mxu0 0.0
    %741 = vmatprep.subr.mxu0 0.0
    %742 = vmatpush1.msra.mxu0 0.0
    %743 = vmatprep.subr.mxu0 0.0
    %744 = vmatpush1.msra.mxu0 0.0
    %745 = vmatprep.subr.mxu0 0.0
    %746 = vmatpush1.msra.mxu0 0.0
    %747 = vmatprep.subr.mxu0 0.0
    %748 = vmatpush1.msra.mxu0 0.0
    %749 = vmatprep.subr.mxu0 0.0
    %750 = vmatpush1.msra.mxu0 0.0
    %751 = vmatprep.subr.mxu0 0.0
    %752 = vmatpush1.msra.mxu0 0.0
    %753 = vmatprep.subr.mxu0 0.0
    %754 = vmatpush1.msra.mxu0 0.0
    %755 = vmatprep.subr.mxu0 0.0
    %756 = vmatpush1.msra.mxu0 0.0
    %757 = vmatprep.subr.mxu0 0.0
    %758 = vmatpush1.msra.mxu0 0.0
    %759 = vmatprep.subr.mxu0 0.0
    %760 = vmatpush1.msra.mxu0 0.0
    %761 = vmatprep.subr.mxu0 0.0
    %762 = vmatpush1.msra.mxu0 0.0
    %763 = vmatprep.subr.mxu0 0.0
    %764 = vmatpush1.msra.mxu0 0.0
    %765 = vmatprep.subr.mxu0 0.0
    %766 = vmatpush1.msra.mxu0 0.0
    %767 = vmatprep.subr.mxu0 0.0
    %768 = vmatpush1.msra.mxu0 0.0
    %769 = vmatprep.subr.mxu0 0.0
    %770 = vmatpush1.msra.mxu0 0.0
    %771 = vmatprep.mubr.f32.mxu0 0.0
    %772 = vmatmul.mubr.f32.gmra.mrb[0].mxu0 %v705
    %v773 = vpop.f32.mrb[0].mxu0
    %v774 = vadd.f32 0.0, %v773
    %v775 = vpop.f32.mrb[0].mxu0
    %v776 = vadd.f32 0.0, %v775
    %777 = vdwg.mxu0
    %778 = vmatprep.subr.mxu0 %v671
    %779 = vmatpush1.msra.mxu0 %v670
    %780 = vmatprep.subr.mxu0 %v675
    %781 = vmatpush1.msra.mxu0 %v674
    %782 = vmatprep.subr.mxu0 %v679
    %783 = vmatpush1.msra.mxu0 %v678
    %784 = vmatprep.subr.mxu0 %v683
    %785 = vmatpush1.msra.mxu0 %v682
    %786 = vmatprep.subr.mxu0 %v687
    %787 = vmatpush1.msra.mxu0 %v686
    %788 = vmatprep.subr.mxu0 %v691
    %789 = vmatpush1.msra.mxu0 %v690
    %790 = vmatprep.subr.mxu0 %v695
    %791 = vmatpush1.msra.mxu0 %v694
    %792 = vmatprep.subr.mxu0 %v699
    %793 = vmatpush1.msra.mxu0 %v698
    %794 = vmatprep.subr.mxu0 %v703
    %795 = vmatpush1.msra.mxu0 %v702
    %796 = vmatprep.subr.mxu0 0.0
    %797 = vmatpush1.msra.mxu0 0.0
    %798 = vmatprep.subr.mxu0 0.0
    %799 = vmatpush1.msra.mxu0 0.0
    %800 = vmatprep.subr.mxu0 0.0
    %801 = vmatpush1.msra.mxu0 0.0
    %802 = vmatprep.subr.mxu0 0.0
    %803 = vmatpush1.msra.mxu0 0.0
    %804 = vmatprep.subr.mxu0 0.0
    %805 = vmatpush1.msra.mxu0 0.0
    %806 = vmatprep.subr.mxu0 0.0
    %807 = vmatpush1.msra.mxu0 0.0
    %808 = vmatprep.subr.mxu0 0.0
    %809 = vmatpush1.msra.mxu0 0.0
    %810 = vmatprep.subr.mxu0 0.0
    %811 = vmatpush1.msra.mxu0 0.0
    %812 = vmatprep.subr.mxu0 0.0
    %813 = vmatpush1.msra.mxu0 0.0
    %814 = vmatprep.subr.mxu0 0.0
    %815 = vmatpush1.msra.mxu0 0.0
    %816 = vmatprep.subr.mxu0 0.0
    %817 = vmatpush1.msra.mxu0 0.0
    %818 = vmatprep.subr.mxu0 0.0
    %819 = vmatpush1.msra.mxu0 0.0
    %820 = vmatprep.subr.mxu0 0.0
    %821 = vmatpush1.msra.mxu0 0.0
    %822 = vmatprep.subr.mxu0 0.0
    %823 = vmatpush1.msra.mxu0 0.0
    %824 = vmatprep.subr.mxu0 0.0
    %825 = vmatpush1.msra.mxu0 0.0
    %826 = vmatprep.subr.mxu0 0.0
    %827 = vmatpush1.msra.mxu0 0.0
    %828 = vmatprep.subr.mxu0 0.0
    %829 = vmatpush1.msra.mxu0 0.0
    %830 = vmatprep.subr.mxu0 0.0
    %831 = vmatpush1.msra.mxu0 0.0
    %832 = vmatprep.subr.mxu0 0.0
    %833 = vmatpush1.msra.mxu0 0.0
    %834 = vmatprep.subr.mxu0 0.0
    %835 = vmatpush1.msra.mxu0 0.0
    %836 = vmatprep.subr.mxu0 0.0
    %837 = vmatpush1.msra.mxu0 0.0
    %838 = vmatprep.subr.mxu0 0.0
    %839 = vmatpush1.msra.mxu0 0.0
    %840 = vmatprep.subr.mxu0 0.0
    %841 = vmatpush1.msra.mxu0 0.0
    %842 = vmatprep.mubr.f32.mxu0 0.0
    %843 = vmatmul.mubr.f32.gmra.mrb[0].mxu0 %v705
    %v844 = vpop.f32.mrb[0].mxu0
    %v845 = vadd.f32 0.0, %v844
    %v846 = vpop.f32.mrb[0].mxu0
    %v847 = vadd.f32 0.0, %v846
    %848 = vdwg.mxu0
    %v849 = vmul.f32 %v774, 0.1
    %v850 = vmul.f32 %v776, 0.1
    %v851 = vmul.f32 %v845, 0.1
    %v852 = vmul.f32 %v847, 0.1
    %v853 = vmax.f32 %v774, %v849
    %v854 = vmax.f32 %v776, %v850
    %v855 = vmax.f32 %v845, %v851
    %v856 = vmax.f32 %v847, %v852
    %857 = vrot.lane.b32.xlu0 %v853, 17
    %v858 = vpop.permute.xlu0 %857
    %859 = vrot.lane.b32.xlu0 %v854, 17
    %v860 = vpop.permute.xlu0 %859
    %861 = vrot.lane.b32.xlu0 %v855, 17
    %v862 = vpop.permute.xlu0 %861
    %863 = vrot.lane.b32.xlu0 %v856, 17
    %v864 = vpop.permute.xlu0 %863
    %v865 = vsel %vm84, %v862, %v864
    %v866 = vsel %vm84, %v860, %v862
    %v867 = vsel %vm84, %v858, %v860
    %v868 = vsel %vm84, %v864, %v858
    %v869 = vld [vmem:[#allocation6] sm:$0xff]
    %v870 = vld [vmem:[#allocation6 + $0x8] sm:$0xff]
    %v871 = vld [vmem:[#allocation6 + $0x10] sm:$0xff]
    %v872 = vld [vmem:[#allocation6 + $0x18] sm:$0xff]
    %v873 = vmul.f32 %v868, %v869
    %v874 = vmul.f32 %v867, %v870
    %v875 = vmul.f32 %v866, %v871
    %v876 = vmul.f32 %v865, %v872
    %877 = vst [vmem:[#allocation2] sm:$0xff] %v873
    %878 = vst [vmem:[#allocation2 + $0x8] sm:$0xff] %v874
    %879 = vst [vmem:[#allocation2 + $0x10] sm:$0xff] %v875
    %880 = vst [vmem:[#allocation2 + $0x18] sm:$0xff] %v876
    %881 = vrot.lane.b32.xlu0 %v853, 16
    %v882 = vpop.permute.xlu0 %881
    %883 = vrot.lane.b32.xlu0 %v854, 16
    %v884 = vpop.permute.xlu0 %883
    %885 = vrot.lane.b32.xlu0 %v855, 16
    %v886 = vpop.permute.xlu0 %885
    %887 = vrot.lane.b32.xlu0 %v856, 16
    %v888 = vpop.permute.xlu0 %887
    %v889 = vsel %vm109, %v886, %v888
    %v890 = vsel %vm109, %v884, %v886
    %v891 = vsel %vm109, %v882, %v884
    %v892 = vsel %vm109, %v888, %v882
    %v893 = vld [vmem:[#allocation6 + $0x20] sm:$0xff]
    %v894 = vld [vmem:[#allocation6 + $0x28] sm:$0xff]
    %v895 = vld [vmem:[#allocation6 + $0x30] sm:$0xff]
    %v896 = vld [vmem:[#allocation6 + $0x38] sm:$0xff]
    %v897 = vmul.f32 %v892, %v893
    %v898 = vmul.f32 %v891, %v894
    %v899 = vmul.f32 %v890, %v895
    %v900 = vmul.f32 %v889, %v896
    %901 = vst [vmem:[#allocation2 + $0x20] sm:$0xff] %v897
    %902 = vst [vmem:[#allocation2 + $0x28] sm:$0xff] %v898
    %903 = vst [vmem:[#allocation2 + $0x30] sm:$0xff] %v899
    %904 = vst [vmem:[#allocation2 + $0x38] sm:$0xff] %v900
    %905 = vrot.lane.b32.xlu0 %v853, 15
    %v906 = vpop.permute.xlu0 %905
    %907 = vrot.lane.b32.xlu0 %v854, 15
    %v908 = vpop.permute.xlu0 %907
    %909 = vrot.lane.b32.xlu0 %v855, 15
    %v910 = vpop.permute.xlu0 %909
    %911 = vrot.lane.b32.xlu0 %v856, 15
    %v912 = vpop.permute.xlu0 %911
    %v913 = vsel %vm134, %v910, %v912
    %v914 = vsel %vm134, %v908, %v910
    %v915 = vsel %vm134, %v906, %v908
    %v916 = vsel %vm134, %v912, %v906
    %v917 = vld [vmem:[#allocation6 + $0x40] sm:$0xff]
    %v918 = vld [vmem:[#allocation6 + $0x48] sm:$0xff]
    %v919 = vld [vmem:[#allocation6 + $0x50] sm:$0xff]
    %v920 = vld [vmem:[#allocation6 + $0x58] sm:$0xff]
    %v921 = vmul.f32 %v916, %v917
    %v922 = vmul.f32 %v915, %v918
    %v923 = vmul.f32 %v914, %v919
    %v924 = vmul.f32 %v913, %v920
    %925 = vst [vmem:[#allocation2 + $0x40] sm:$0xff] %v921
    %926 = vst [vmem:[#allocation2 + $0x48] sm:$0xff] %v922
    %927 = vst [vmem:[#allocation2 + $0x50] sm:$0xff] %v923
    %928 = vst [vmem:[#allocation2 + $0x58] sm:$0xff] %v924
    %929 = vrot.lane.b32.xlu0 %v853, 1
    %v930 = vpop.permute.xlu0 %929
    %931 = vrot.lane.b32.xlu0 %v854, 1
    %v932 = vpop.permute.xlu0 %931
    %933 = vrot.lane.b32.xlu0 %v855, 1
    %v934 = vpop.permute.xlu0 %933
    %935 = vrot.lane.b32.xlu0 %v856, 1
    %v936 = vpop.permute.xlu0 %935
    %v937 = vsel %vm159, %v934, %v936
    %v938 = vsel %vm159, %v932, %v934
    %v939 = vsel %vm159, %v930, %v932
    %v940 = vsel %vm159, %v936, %v930
    %v941 = vld [vmem:[#allocation6 + $0x60] sm:$0xff]
    %v942 = vld [vmem:[#allocation6 + $0x68] sm:$0xff]
    %v943 = vld [vmem:[#allocation6 + $0x70] sm:$0xff]
    %v944 = vld [vmem:[#allocation6 + $0x78] sm:$0xff]
    %v945 = vmul.f32 %v940, %v941
    %v946 = vmul.f32 %v939, %v942
    %v947 = vmul.f32 %v938, %v943
    %v948 = vmul.f32 %v937, %v944
    %949 = vst [vmem:[#allocation2 + $0x60] sm:$0xff] %v945
    %950 = vst [vmem:[#allocation2 + $0x68] sm:$0xff] %v946
    %951 = vst [vmem:[#allocation2 + $0x70] sm:$0xff] %v947
    %952 = vst [vmem:[#allocation2 + $0x78] sm:$0xff] %v948
    %953 = vst [vmem:[#allocation2 + $0x80] sm:$0xff] %v853
    %954 = vst [vmem:[#allocation2 + $0x88] sm:$0xff] %v854
    %955 = vst [vmem:[#allocation2 + $0x90] sm:$0xff] %v855
    %956 = vst [vmem:[#allocation2 + $0x98] sm:$0xff] %v856
    %957 = vrot.lane.b32.xlu0 %v853, 127
    %v958 = vpop.permute.xlu0 %957
    %959 = vrot.lane.b32.xlu0 %v854, 127
    %v960 = vpop.permute.xlu0 %959
    %961 = vrot.lane.b32.xlu0 %v855, 127
    %v962 = vpop.permute.xlu0 %961
    %963 = vrot.lane.b32.xlu0 %v856, 127
    %v964 = vpop.permute.xlu0 %963
    %v965 = vsel %vm188, %v962, %v964
    %v966 = vsel %vm188, %v960, %v962
    %v967 = vsel %vm188, %v958, %v960
    %v968 = vsel %vm188, %v964, %v958
    %v969 = vld [vmem:[#allocation6 + $0xa0] sm:$0xff]
    %v970 = vld [vmem:[#allocation6 + $0xa8] sm:$0xff]
    %v971 = vld [vmem:[#allocation6 + $0xb0] sm:$0xff]
    %v972 = vld [vmem:[#allocation6 + $0xb8] sm:$0xff]
    %v973 = vmul.f32 %v967, %v969
    %v974 = vmul.f32 %v966, %v970
    %v975 = vmul.f32 %v965, %v971
    %v976 = vmul.f32 %v968, %v972
    %977 = vst [vmem:[#allocation2 + $0xa0] sm:$0xff] %v973
    %978 = vst [vmem:[#allocation2 + $0xa8] sm:$0xff] %v974
    %979 = vst [vmem:[#allocation2 + $0xb0] sm:$0xff] %v975
    %980 = vst [vmem:[#allocation2 + $0xb8] sm:$0xff] %v976
    %981 = vrot.lane.b32.xlu0 %v853, 113
    %v982 = vpop.permute.xlu0 %981
    %983 = vrot.lane.b32.xlu0 %v854, 113
    %v984 = vpop.permute.xlu0 %983
    %985 = vrot.lane.b32.xlu0 %v855, 113
    %v986 = vpop.permute.xlu0 %985
    %987 = vrot.lane.b32.xlu0 %v856, 113
    %v988 = vpop.permute.xlu0 %987
    %v989 = vsel %vm213, %v986, %v988
    %v990 = vsel %vm213, %v984, %v986
    %v991 = vsel %vm213, %v982, %v984
    %v992 = vsel %vm213, %v988, %v982
    %v993 = vld [vmem:[#allocation6 + $0xc0] sm:$0xff]
    %v994 = vld [vmem:[#allocation6 + $0xc8] sm:$0xff]
    %v995 = vld [vmem:[#allocation6 + $0xd0] sm:$0xff]
    %v996 = vld [vmem:[#allocation6 + $0xd8] sm:$0xff]
    %v997 = vmul.f32 %v991, %v993
    %v998 = vmul.f32 %v990, %v994
    %v999 = vmul.f32 %v989, %v995
    %v1000 = vmul.f32 %v992, %v996
    %1001 = vst [vmem:[#allocation2 + $0xc0] sm:$0xff] %v997
    %1002 = vst [vmem:[#allocation2 + $0xc8] sm:$0xff] %v998
    %1003 = vst [vmem:[#allocation2 + $0xd0] sm:$0xff] %v999
    %1004 = vst [vmem:[#allocation2 + $0xd8] sm:$0xff] %v1000
    %1005 = vrot.lane.b32.xlu0 %v853, 112
    %v1006 = vpop.permute.xlu0 %1005
    %1007 = vrot.lane.b32.xlu0 %v854, 112
    %v1008 = vpop.permute.xlu0 %1007
    %1009 = vrot.lane.b32.xlu0 %v855, 112
    %v1010 = vpop.permute.xlu0 %1009
    %1011 = vrot.lane.b32.xlu0 %v856, 112
    %v1012 = vpop.permute.xlu0 %1011
    %v1013 = vsel %vm238, %v1010, %v1012
    %v1014 = vsel %vm238, %v1008, %v1010
    %v1015 = vsel %vm238, %v1006, %v1008
    %v1016 = vsel %vm238, %v1012, %v1006
    %v1017 = vld [vmem:[#allocation6 + $0xe0] sm:$0xff]
    %v1018 = vld [vmem:[#allocation6 + $0xe8] sm:$0xff]
    %v1019 = vld [vmem:[#allocation6 + $0xf0] sm:$0xff]
    %v1020 = vld [vmem:[#allocation6 + $0xf8] sm:$0xff]
    %v1021 = vmul.f32 %v1015, %v1017
    %v1022 = vmul.f32 %v1014, %v1018
    %v1023 = vmul.f32 %v1013, %v1019
    %v1024 = vmul.f32 %v1016, %v1020
    %1025 = vst [vmem:[#allocation2 + $0xe0] sm:$0xff] %v1021
    %1026 = vst [vmem:[#allocation2 + $0xe8] sm:$0xff] %v1022
    %1027 = vst [vmem:[#allocation2 + $0xf0] sm:$0xff] %v1023
    %1028 = vst [vmem:[#allocation2 + $0xf8] sm:$0xff] %v1024
    %1029 = vrot.lane.b32.xlu0 %v853, 111
    %v1030 = vpop.permute.xlu0 %1029
    %1031 = vrot.lane.b32.xlu0 %v854, 111
    %v1032 = vpop.permute.xlu0 %1031
    %1033 = vrot.lane.b32.xlu0 %v855, 111
    %v1034 = vpop.permute.xlu0 %1033
    %1035 = vrot.lane.b32.xlu0 %v856, 111
    %v1036 = vpop.permute.xlu0 %1035
    %v1037 = vsel %vm263, %v1034, %v1036
    %v1038 = vsel %vm263, %v1032, %v1034
    %v1039 = vsel %vm263, %v1030, %v1032
    %v1040 = vsel %vm263, %v1036, %v1030
    %v1041 = vld [vmem:[#allocation6 + $0x100] sm:$0xff]
    %v1042 = vld [vmem:[#allocation6 + $0x108] sm:$0xff]
    %v1043 = vld [vmem:[#allocation6 + $0x110] sm:$0xff]
    %v1044 = vld [vmem:[#allocation6 + $0x118] sm:$0xff]
    %v1045 = vmul.f32 %v1039, %v1041
    %v1046 = vmul.f32 %v1038, %v1042
    %v1047 = vmul.f32 %v1037, %v1043
    %v1048 = vmul.f32 %v1040, %v1044
    %1049 = vst [vmem:[#allocation2 + $0x100] sm:$0xff] %v1045
    %1050 = vst [vmem:[#allocation2 + $0x108] sm:$0xff] %v1046
    %1051 = vst [vmem:[#allocation2 + $0x110] sm:$0xff] %v1047
    %1052 = vst [vmem:[#allocation2 + $0x118] sm:$0xff] %v1048
    %v1053 = vld [vmem:[#allocation9] sm:$0xff]
    %v1054 = vld [vmem:[#allocation2] sm:$0xff]
    %v1055 = vld [vmem:[#allocation2 + $0x8] sm:$0xff]
    %v1056 = vld [vmem:[#allocation2 + $0x10] sm:$0xff]
    %v1057 = vld [vmem:[#allocation2 + $0x18] sm:$0xff]
    %v1058 = vld [vmem:[#allocation2 + $0x20] sm:$0xff]
    %v1059 = vld [vmem:[#allocation2 + $0x28] sm:$0xff]
    %v1060 = vld [vmem:[#allocation2 + $0x30] sm:$0xff]
    %v1061 = vld [vmem:[#allocation2 + $0x38] sm:$0xff]
    %v1062 = vld [vmem:[#allocation2 + $0x40] sm:$0xff]
    %v1063 = vld [vmem:[#allocation2 + $0x48] sm:$0xff]
    %v1064 = vld [vmem:[#allocation2 + $0x50] sm:$0xff]
    %v1065 = vld [vmem:[#allocation2 + $0x58] sm:$0xff]
    %v1066 = vld [vmem:[#allocation2 + $0x60] sm:$0xff]
    %v1067 = vld [vmem:[#allocation2 + $0x68] sm:$0xff]
    %v1068 = vld [vmem:[#allocation2 + $0x70] sm:$0xff]
    %v1069 = vld [vmem:[#allocation2 + $0x78] sm:$0xff]
    %v1070 = vld [vmem:[#allocation2 + $0x80] sm:$0xff]
    %v1071 = vld [vmem:[#allocation2 + $0x88] sm:$0xff]
    %v1072 = vld [vmem:[#allocation2 + $0x90] sm:$0xff]
    %v1073 = vld [vmem:[#allocation2 + $0x98] sm:$0xff]
    %v1074 = vld [vmem:[#allocation2 + $0xa0] sm:$0xff]
    %v1075 = vld [vmem:[#allocation2 + $0xa8] sm:$0xff]
    %v1076 = vld [vmem:[#allocation2 + $0xb0] sm:$0xff]
    %v1077 = vld [vmem:[#allocation2 + $0xb8] sm:$0xff]
    %v1078 = vld [vmem:[#allocation2 + $0xc0] sm:$0xff]
    %v1079 = vld [vmem:[#allocation2 + $0xc8] sm:$0xff]
    %v1080 = vld [vmem:[#allocation2 + $0xd0] sm:$0xff]
    %v1081 = vld [vmem:[#allocation2 + $0xd8] sm:$0xff]
    %v1082 = vld [vmem:[#allocation2 + $0xe0] sm:$0xff]
    %v1083 = vld [vmem:[#allocation2 + $0xe8] sm:$0xff]
    %v1084 = vld [vmem:[#allocation2 + $0xf0] sm:$0xff]
    %v1085 = vld [vmem:[#allocation2 + $0xf8] sm:$0xff]
    %v1086 = vld [vmem:[#allocation2 + $0x100] sm:$0xff]
    %v1087 = vld [vmem:[#allocation2 + $0x108] sm:$0xff]
    %v1088 = vld [vmem:[#allocation2 + $0x110] sm:$0xff]
    %v1089 = vld [vmem:[#allocation2 + $0x118] sm:$0xff]
    %v1091 = vsel %vm317, %v1053, 0
    %1093 = vmatprep.subr.mxu0 %v1055
    %1094 = vmatpush1.msra.mxu0 %v1054
    %1095 = vmatprep.subr.mxu0 %v1059
    %1096 = vmatpush1.msra.mxu0 %v1058
    %1097 = vmatprep.subr.mxu0 %v1063
    %1098 = vmatpush1.msra.mxu0 %v1062
    %1099 = vmatprep.subr.mxu0 %v1067
    %1100 = vmatpush1.msra.mxu0 %v1066
    %1101 = vmatprep.subr.mxu0 %v1071
    %1102 = vmatpush1.msra.mxu0 %v1070
    %1103 = vmatprep.subr.mxu0 %v1075
    %1104 = vmatpush1.msra.mxu0 %v1074
    %1105 = vmatprep.subr.mxu0 %v1079
    %1106 = vmatpush1.msra.mxu0 %v1078
    %1107 = vmatprep.subr.mxu0 %v1083
    %1108 = vmatpush1.msra.mxu0 %v1082
    %1109 = vmatprep.subr.mxu0 %v1087
    %1110 = vmatpush1.msra.mxu0 %v1086
    %1111 = vmatprep.subr.mxu0 0.0
    %1112 = vmatpush1.msra.mxu0 0.0
    %1113 = vmatprep.subr.mxu0 0.0
    %1114 = vmatpush1.msra.mxu0 0.0
    %1115 = vmatprep.subr.mxu0 0.0
    %1116 = vmatpush1.msra.mxu0 0.0
    %1117 = vmatprep.subr.mxu0 0.0
    %1118 = vmatpush1.msra.mxu0 0.0
    %1119 = vmatprep.subr.mxu0 0.0
    %1120 = vmatpush1.msra.mxu0 0.0
    %1121 = vmatprep.subr.mxu0 0.0
    %1122 = vmatpush1.msra.mxu0 0.0
    %1123 = vmatprep.subr.mxu0 0.0
    %1124 = vmatpush1.msra.mxu0 0.0
    %1125 = vmatprep.subr.mxu0 0.0
    %1126 = vmatpush1.msra.mxu0 0.0
    %1127 = vmatprep.subr.mxu0 0.0
    %1128 = vmatpush1.msra.mxu0 0.0
    %1129 = vmatprep.subr.mxu0 0.0
    %1130 = vmatpush1.msra.mxu0 0.0
    %1131 = vmatprep.subr.mxu0 0.0
    %1132 = vmatpush1.msra.mxu0 0.0
    %1133 = vmatprep.subr.mxu0 0.0
    %1134 = vmatpush1.msra.mxu0 0.0
    %1135 = vmatprep.subr.mxu0 0.0
    %1136 = vmatpush1.msra.mxu0 0.0
    %1137 = vmatprep.subr.mxu0 0.0
    %1138 = vmatpush1.msra.mxu0 0.0
    %1139 = vmatprep.subr.mxu0 0.0
    %1140 = vmatpush1.msra.mxu0 0.0
    %1141 = vmatprep.subr.mxu0 0.0
    %1142 = vmatpush1.msra.mxu0 0.0
    %1143 = vmatprep.subr.mxu0 0.0
    %1144 = vmatpush1.msra.mxu0 0.0
    %1145 = vmatprep.subr.mxu0 0.0
    %1146 = vmatpush1.msra.mxu0 0.0
    %1147 = vmatprep.subr.mxu0 0.0
    %1148 = vmatpush1.msra.mxu0 0.0
    %1149 = vmatprep.subr.mxu0 0.0
    %1150 = vmatpush1.msra.mxu0 0.0
    %1151 = vmatprep.subr.mxu0 0.0
    %1152 = vmatpush1.msra.mxu0 0.0
    %1153 = vmatprep.subr.mxu0 0.0
    %1154 = vmatpush1.msra.mxu0 0.0
    %1155 = vmatprep.subr.mxu0 0.0
    %1156 = vmatpush1.msra.mxu0 0.0
    %1157 = vmatprep.mubr.f32.mxu0 0.0
    %1158 = vmatmul.mubr.f32.gmra.mrb[0].mxu0 %v1091
    %v1159 = vpop.f32.mrb[0].mxu0
    %v1160 = vadd.f32 0.0, %v1159
    %v1161 = vpop.f32.mrb[0].mxu0
    %v1162 = vadd.f32 0.0, %v1161
    %1163 = vdwg.mxu0
    %1164 = vmatprep.subr.mxu0 %v1057
    %1165 = vmatpush1.msra.mxu0 %v1056
    %1166 = vmatprep.subr.mxu0 %v1061
    %1167 = vmatpush1.msra.mxu0 %v1060
    %1168 = vmatprep.subr.mxu0 %v1065
    %1169 = vmatpush1.msra.mxu0 %v1064
    %1170 = vmatprep.subr.mxu0 %v1069
    %1171 = vmatpush1.msra.mxu0 %v1068
    %1172 = vmatprep.subr.mxu0 %v1073
    %1173 = vmatpush1.msra.mxu0 %v1072
    %1174 = vmatprep.subr.mxu0 %v1077
    %1175 = vmatpush1.msra.mxu0 %v1076
    %1176 = vmatprep.subr.mxu0 %v1081
    %1177 = vmatpush1.msra.mxu0 %v1080
    %1178 = vmatprep.subr.mxu0 %v1085
    %1179 = vmatpush1.msra.mxu0 %v1084
    %1180 = vmatprep.subr.mxu0 %v1089
    %1181 = vmatpush1.msra.mxu0 %v1088
    %1182 = vmatprep.subr.mxu0 0.0
    %1183 = vmatpush1.msra.mxu0 0.0
    %1184 = vmatprep.subr.mxu0 0.0
    %1185 = vmatpush1.msra.mxu0 0.0
    %1186 = vmatprep.subr.mxu0 0.0
    %1187 = vmatpush1.msra.mxu0 0.0
    %1188 = vmatprep.subr.mxu0 0.0
    %1189 = vmatpush1.msra.mxu0 0.0
    %1190 = vmatprep.subr.mxu0 0.0
    %1191 = vmatpush1.msra.mxu0 0.0
    %1192 = vmatprep.subr.mxu0 0.0
    %1193 = vmatpush1.msra.mxu0 0.0
    %1194 = vmatprep.subr.mxu0 0.0
    %1195 = vmatpush1.msra.mxu0 0.0
    %1196 = vmatprep.subr.mxu0 0.0
    %1197 = vmatpush1.msra.mxu0 0.0
    %1198 = vmatprep.subr.mxu0 0.0
    %1199 = vmatpush1.msra.mxu0 0.0
    %1200 = vmatprep.subr.mxu0 0.0
    %1201 = vmatpush1.msra.mxu0 0.0
    %1202 = vmatprep.subr.mxu0 0.0
    %1203 = vmatpush1.msra.mxu0 0.0
    %1204 = vmatprep.subr.mxu0 0.0
    %1205 = vmatpush1.msra.mxu0 0.0
    %1206 = vmatprep.subr.mxu0 0.0
    %1207 = vmatpush1.msra.mxu0 0.0
    %1208 = vmatprep.subr.mxu0 0.0
    %1209 = vmatpush1.msra.mxu0 0.0
    %1210 = vmatprep.subr.mxu0 0.0
    %1211 = vmatpush1.msra.mxu0 0.0
    %1212 = vmatprep.subr.mxu0 0.0
    %1213 = vmatpush1.msra.mxu0 0.0
    %1214 = vmatprep.subr.mxu0 0.0
    %1215 = vmatpush1.msra.mxu0 0.0
    %1216 = vmatprep.subr.mxu0 0.0
    %1217 = vmatpush1.msra.mxu0 0.0
    %1218 = vmatprep.subr.mxu0 0.0
    %1219 = vmatpush1.msra.mxu0 0.0
    %1220 = vmatprep.subr.mxu0 0.0
    %1221 = vmatpush1.msra.mxu0 0.0
    %1222 = vmatprep.subr.mxu0 0.0
    %1223 = vmatpush1.msra.mxu0 0.0
    %1224 = vmatprep.subr.mxu0 0.0
    %1225 = vmatpush1.msra.mxu0 0.0
    %1226 = vmatprep.subr.mxu0 0.0
    %1227 = vmatpush1.msra.mxu0 0.0
    %1228 = vmatprep.mubr.f32.mxu0 0.0
    %1229 = vmatmul.mubr.f32.gmra.mrb[0].mxu0 %v1091
    %v1230 = vpop.f32.mrb[0].mxu0
    %v1231 = vadd.f32 0.0, %v1230
    %v1232 = vpop.f32.mrb[0].mxu0
    %v1233 = vadd.f32 0.0, %v1232
    %1234 = vdwg.mxu0
    %v1235 = vmul.f32 %v1160, 0.1
    %v1236 = vmul.f32 %v1162, 0.1
    %v1237 = vmul.f32 %v1231, 0.1
    %v1238 = vmul.f32 %v1233, 0.1
    %v1239 = vmax.f32 %v1160, %v1235
    %v1240 = vmax.f32 %v1162, %v1236
    %v1241 = vmax.f32 %v1231, %v1237
    %v1242 = vmax.f32 %v1233, %v1238
    %1243 = vst [vmem:[#allocation11] sm:$0xff] %v1239
    %1244 = vst [vmem:[#allocation11 + $0x8] sm:$0xff] %v1240
    %1245 = vst [vmem:[#allocation11 + $0x10] sm:$0xff] %v1241
    %1246 = vst [vmem:[#allocation11 + $0x18] sm:$0xff] %v1242
    // Predicated region
    $region38: #{tpu_custom_call.1} parent=1 // pred_check
      _
    $region39: #{tpu_custom_call.1} parent=1 // pred_check_branch
      %1248 = sbr.rel (0) target = $region41
    $region40: #{tpu_custom_call.1} parent=1 // pred_region
      %s1250 = ssub.s32 512, 512
      %1251 = vsyncadd [#allocation5], %s1250
      %s1253 = sshll.u32 [#allocation11], 4
      %s1254 = int_to_ptr.vmem [resolvable:$true] %s1253
      %1256 = dma.vmem_to_hbm [thread:$0]  %s1254, 512, %s5, [#allocation5]
    $region41: #{tpu_custom_call.1} parent=1 // pred_fallthru
      _
    // Predicated region
    $region42: #{tpu_custom_call.1} parent=1 // pred_check
      _
    $region43: #{tpu_custom_call.1} parent=1 // pred_check_branch
      %1258 = sbr.rel (0) target = $region45
    $region44: #{tpu_custom_call.1} parent=1 // pred_region
      %1259 = dma.done [#allocation5], 512
    $region45: #{tpu_custom_call.1} parent=1 // pred_fallthru
      _
    %1260 = vsyncpa [#allocation4], 1
    %1261 = vsyncpa [#allocation7], 1
    %1262 = vsyncpa [#allocation10], 1
    %1263 = vsyncpa [#allocation5], 1

</llo_original>
